<compile_context>
chip_gen: v7x
topology: tpu7x:2x2x1
jax: 0.10.0
libtpu: 0.0.40
codegen_flags: <defaults>
</compile_context>

<pallas_src>
import jax
import jax.numpy as jnp
from jax.experimental import pallas as pl
from jax.experimental.pallas import tpu as pltpu


# ----------------------------------------------------------------------------- jetLSTM kernel
def jetlstm_kernel(tmax_ref, idx_ref, x_ref,
                   wih0_ref, whh0_ref, b0_ref, w1_ref, b1_ref,
                   out_ref, gx_ref, hc_ref):
    nh4, seq_bt = gx_ref.shape            # (4*nh, seq * b_tile)
    nh = nh4 // 4
    bt = out_ref.shape[1]
    seq = seq_bt // bt
    cdt = whh0_ref.dtype                  # bf16 MXU operand dtype

    # Longest real sequence in this batch tile (scalar-prefetched into SMEM).
    t_max = tmax_ref[pl.program_id(0)]

    # ---- hoisted loop-invariant loads / broadcasts (no per-step VMEM reload, no per-step
    #      broadcast_in_dim inside the recurrence).
    whh0 = whh0_ref[...]                                            # (4nh, nh)   bf16
    w1 = w1_ref[...]                                                # (4nh, 2nh)  bf16
    b1b = jnp.broadcast_to(b1_ref[...], (nh4, bt))                  # (4nh, bt)   f32
    idx_b = jnp.broadcast_to(idx_ref[...], (nh, bt))                # (nh, bt)    i32

    # ---- phase 1: layer-0 input projection for ALL timesteps as ONE matmul, off the serial
    #      recurrent chain.  x_ref column s*bt + b  <->  (timestep s, local batch b).
    gx_ref[...] = (jnp.dot(wih0_ref[...], x_ref[...],
                           preferred_element_type=jnp.float32)
                   + b0_ref[...])                                   # (4nh, seq*bt) f32

    def sigmoid(v):
        # single EUP push (tanh) instead of exp + divide
        return 0.5 * jnp.tanh(0.5 * v) + 0.5

    def gate_act(gates, c):
        # PyTorch gate order i, f, g, o as sublane slices of (4nh, bt); f32 activation math
        # (portable to v5e; bf16 activations are a v6e/v7x-only option).
        i_g = sigmoid(gates[0 * nh:1 * nh])
        f_g = sigmoid(gates[1 * nh:2 * nh])
        g_g = jnp.tanh(gates[2 * nh:3 * nh])
        o_g = sigmoid(gates[3 * nh:4 * nh])
        c_new = f_g * c + i_g * g_g
        return o_g * jnp.tanh(c_new), c_new

    # Persistent [h0 ; h1] slab so the fused layer-1 matmul reads one contiguous operand
    # (no per-step concatenate).  Re-zeroed every invocation (scratch persists across tiles).
    hc_ref[...] = jnp.zeros(hc_ref.shape, hc_ref.dtype)

    # ---- phase 2: recurrence, software-pipelined across the layer boundary.  Layer-0 gates for
    #      step t+1 are issued right after h0(t) so their Whh0 matmul overlaps with the layer-1
    #      matmul + EUP activations of step t; each iteration starts directly on EUP work.
    def step(t, carry):
        c0, c1, out, gates0_t = carry

        h0, c0 = gate_act(gates0_t, c0)                             # layer-0 activations, step t
        hc_ref[0:nh, :] = h0

        t_next = jnp.minimum(t + 1, seq - 1)                        # clamp keeps the read in-bounds
        col = pl.multiple_of(t_next * bt, bt)                       # lane-tile aligned slice
        gates0_next = (gx_ref[:, pl.ds(col, bt)]
                       + jnp.dot(whh0, h0.astype(cdt),
                                 preferred_element_type=jnp.float32))

        gates1 = (jnp.dot(w1, hc_ref[...].astype(cdt),              # [h0(t) ; h1(t-1)]
                          preferred_element_type=jnp.float32) + b1b)
        h1, c1 = gate_act(gates1, c1)
        hc_ref[nh:2 * nh, :] = h1

        out = jnp.where(idx_b == t, h1, out)                        # hidden at last valid timestep
        return (c0, c1, out, gates0_next)

    z = jnp.zeros((nh, bt), jnp.float32)
    g0 = gx_ref[:, pl.ds(0, bt)]                                    # h0(-1) == 0 -> no Whh0 term
    carry = jax.lax.fori_loop(0, t_max, step, (z, z, z, g0))
    out_ref[...] = carry[2]                                         # (nh, bt), lane-dense store


def jet_lstm_forward(js, params, *, b_tile=128, sort_by_length=True):
    """js: (batch, nj, seq) float32 (PyTorch NCL layout).  Returns (batch, nh, 1)."""
    batch, nj, seq = js.shape
    nh4 = params["whh0"].shape[0]
    nh = nh4 // 4
    cdt = params["whh0"].dtype

    # ls = (js[:, 1, :] != 0).sum(1); idx = ls + (ls == 0) - 1   (wrapper-side, like the model)
    # NOTE: sequence length is inferred from the "feature-1 != 0" sentinel, inherited from jetLSTM.
    ls = jnp.sum((js[:, 1, :] != 0).astype(jnp.int32), axis=1)
    idx = ls + (ls == 0).astype(jnp.int32) - 1

    # Bucket events by length so each tile's t_max is tight (wasted recurrent steps dominate the
    # cost); the permutation is undone on output.
    if sort_by_length:
        order = jnp.argsort(ls)
        inv = jnp.argsort(order)
    else:
        order = jnp.arange(batch)
        inv = order

    pb = pl.cdiv(batch, b_tile) * b_tile
    num_tiles = pb // b_tile            # batch=160, b_tile=128 -> 2 tiles (keeps 2 TCs busy on v7x)
    pad = pb - batch

    x = jnp.transpose(js, (1, 2, 0))[:, :, order].astype(cdt)       # (nj, seq, batch), sorted
    idx_s = idx[order].astype(jnp.int32)
    if pad:
        x = jnp.pad(x, ((0, 0), (0, 0), (0, pad)))
        idx_s = jnp.pad(idx_s, (0, pad))

    # Per-tile lane-dense slab: (num_tiles, nj, seq*b_tile); column s*b_tile + local_batch.
    x = x.reshape(nj, seq, num_tiles, b_tile)
    x = jnp.transpose(x, (2, 0, 1, 3)).reshape(num_tiles, nj, seq * b_tile)

    idx2d = idx_s.reshape(1, pb)
    tile_tmax = jnp.max(idx_s.reshape(num_tiles, b_tile), axis=1) + 1

    grid_spec = pltpu.PrefetchScalarGridSpec(
        num_scalar_prefetch=1,
        grid=(num_tiles,),
        in_specs=[
            pl.BlockSpec((1, b_tile), lambda i, tmax: (0, i)),                 # idx (int32)
            pl.BlockSpec((None, nj, seq * b_tile), lambda i, tmax: (i, 0, 0)), # x slab (tile dim squeezed)
            pl.BlockSpec((nh4, nj), lambda i, tmax: (0, 0)),                   # Wih0
            pl.BlockSpec((nh4, nh), lambda i, tmax: (0, 0)),                   # Whh0
            pl.BlockSpec((nh4, 1), lambda i, tmax: (0, 0)),                    # b0 (broadcast in-kernel)
            pl.BlockSpec((nh4, 2 * nh), lambda i, tmax: (0, 0)),               # [Wih1 | Whh1] fused
            pl.BlockSpec((nh4, 1), lambda i, tmax: (0, 0)),                    # b1 (broadcast in-kernel)
        ],
        out_specs=pl.BlockSpec((nh, b_tile), lambda i, tmax: (0, i)),
        scratch_shapes=[
            # TODO(synk): on v7x (64 MiB VMEM) store gx in bf16 / re-budget before raising b_tile.
            pltpu.VMEM((nh4, seq * b_tile), jnp.float32),    # hoisted layer-0 projection
            pltpu.VMEM((2 * nh, b_tile), jnp.float32),       # persistent [h0 ; h1] slab
        ],
    )

    out = pl.pallas_call(
        jetlstm_kernel,
        out_shape=jax.ShapeDtypeStruct((nh, pb), jnp.float32),
        grid_spec=grid_spec,
        compiler_params=pltpu.CompilerParams(dimension_semantics=("parallel",)),
    )(tile_tmax, idx2d, x,
      params["wih0"], params["whh0"], params["b0"], params["w1"], params["b1"])

    h = out[:, :batch][:, inv].T                                     # unsort -> (batch, nh)
    return h.reshape(batch, nh, 1)


def init_params(key, nj, nh, *, compute_dtype=jnp.bfloat16):
    """PyTorch-style LSTM init U(-1/sqrt(nh), 1/sqrt(nh)), feature-major, bf16 MXU weights."""
    bound = 1.0 / float(nh) ** 0.5
    keys = jax.random.split(key, 8)

    def u(kk, shape):
        return jax.random.uniform(kk, shape, jnp.float32, -bound, bound)

    w_ih_l0 = u(keys[0], (4 * nh, nj))
    w_hh_l0 = u(keys[1], (4 * nh, nh))
    b_ih_l0 = u(keys[2], (4 * nh,))
    b_hh_l0 = u(keys[3], (4 * nh,))
    w_ih_l1 = u(keys[4], (4 * nh, nh))
    w_hh_l1 = u(keys[5], (4 * nh, nh))
    b_ih_l1 = u(keys[6], (4 * nh,))
    b_hh_l1 = u(keys[7], (4 * nh,))
    return dict(
        wih0=w_ih_l0.astype(compute_dtype),                                   # (4nh, nj)
        whh0=w_hh_l0.astype(compute_dtype),                                   # (4nh, nh)
        b0=(b_ih_l0 + b_hh_l0).reshape(4 * nh, 1),                            # (4nh, 1) f32
        w1=jnp.concatenate([w_ih_l1, w_hh_l1], axis=1).astype(compute_dtype), # (4nh, 2nh) fused
        b1=(b_ih_l1 + b_hh_l1).reshape(4 * nh, 1),                            # (4nh, 1) f32
    )


def jet_lstm_reference(js, params):
    """Pure-JAX reference with the same bf16-operand / f32-accumulate math as the kernel."""
    batch, nj, seq = js.shape
    nh = params["whh0"].shape[0] // 4
    cdt = params["whh0"].dtype
    ls = jnp.sum((js[:, 1, :] != 0).astype(jnp.int32), axis=1)
    idx = ls + (ls == 0).astype(jnp.int32) - 1
    x = jnp.transpose(js, (2, 1, 0)).astype(cdt)                # (seq, nj, batch)

    wih0, whh0, w1 = params["wih0"], params["whh0"], params["w1"]
    b0, b1 = params["b0"], params["b1"]

    def act(g, c):
        i = jax.nn.sigmoid(g[:nh])
        f = jax.nn.sigmoid(g[nh:2 * nh])
        gg = jnp.tanh(g[2 * nh:3 * nh])
        o = jax.nn.sigmoid(g[3 * nh:])
        c = f * c + i * gg
        return o * jnp.tanh(c), c

    def scan_fn(carry, x_t):
        h0, c0, h1, c1 = carry
        g0 = (jnp.dot(wih0, x_t, preferred_element_type=jnp.float32) + b0
              + jnp.dot(whh0, h0.astype(cdt), preferred_element_type=jnp.float32))
        h0, c0 = act(g0, c0)
        hcat = jnp.concatenate([h0, h1], axis=0).astype(cdt)
        g1 = jnp.dot(w1, hcat, preferred_element_type=jnp.float32) + b1
        h1, c1 = act(g1, c1)
        return (h0, c0, h1, c1), h1

    z = jnp.zeros((nh, batch), jnp.float32)
    _, hs = jax.lax.scan(scan_fn, (z, z, z, z), x)              # (seq, nh, batch)
    h = hs[idx, :, jnp.arange(batch)]                           # (batch, nh)
    return h.reshape(batch, nh, 1)


# ------------------------------------------------------------- HCREnsemble score combination
def hcr_ensemble_kernel(c_ref, q_ref, c_out_ref, q_out_ref):
    # HCREnsemble.forward tail: mean over the 3 member nets; softmax over the class axis.
    # Batch-last layout: class/score axis on sublanes, batch on lanes -> lane-dense stores.
    q_out_ref[...] = jnp.mean(q_ref[...], axis=0)               # (nq, bt)
    c = jnp.mean(c_ref[...], axis=0)                            # (nc, bt)
    c = c - jnp.max(c, axis=0, keepdims=True)
    e = jnp.exp(c)
    c_out_ref[...] = e / jnp.sum(e, axis=0, keepdims=True)


def hcr_ensemble_combine(c_scores, q_scores, *, b_tile=128):
    """c_scores: (3, batch, nc), q_scores: (3, batch, nq) -> (softmax(mean c), mean q)."""
    nmem, batch, nc = c_scores.shape
    nq = q_scores.shape[-1]
    pb = pl.cdiv(batch, b_tile) * b_tile
    pad = pb - batch
    # Batch-last (lane-dense) layout; wrapper-side transposes are layout plumbing only.
    c_in = jnp.pad(jnp.transpose(c_scores, (0, 2, 1)).astype(jnp.float32),
                   ((0, 0), (0, 0), (0, pad)))
    q_in = jnp.pad(jnp.transpose(q_scores, (0, 2, 1)).astype(jnp.float32),
                   ((0, 0), (0, 0), (0, pad)))

    c_out, q_out = pl.pallas_call(
        hcr_ensemble_kernel,
        out_shape=(jax.ShapeDtypeStruct((nc, pb), jnp.float32),
                   jax.ShapeDtypeStruct((nq, pb), jnp.float32)),
        grid=(pb // b_tile,),
        in_specs=[pl.BlockSpec((nmem, nc, b_tile), lambda i: (0, 0, i)),
                  pl.BlockSpec((nmem, nq, b_tile), lambda i: (0, 0, i))],
        out_specs=(pl.BlockSpec((nc, b_tile), lambda i: (0, i)),
                   pl.BlockSpec((nq, b_tile), lambda i: (0, i))),
        compiler_params=pltpu.CompilerParams(dimension_semantics=("parallel",)),
    )(c_in, q_in)
    return c_out[:, :batch].T, q_out[:, :batch].T


# ---------------------------------------------------------------------------------------- main
if __name__ == "__main__":
    # Small but grid-exercising shapes: batch=160 spans two 128-wide tiles (padded to 256).
    batch, nj, nh, seq = 160, 4, 32, 8
    key = jax.random.PRNGKey(0)
    k_par, k_js, k_len, k_c, k_q = jax.random.split(key, 5)

    params = init_params(k_par, nj, nh)

    js = jax.random.normal(k_js, (batch, nj, seq), jnp.float32)
    lengths = jax.random.randint(k_len, (batch,), 0, seq + 1)            # includes empty events
    valid = (jnp.arange(seq)[None, :] < lengths[:, None]).astype(jnp.float32)
    js = js * valid[:, None, :]                                          # zero-pad sequence tails

    h = jet_lstm_forward(js, params)
    jax.block_until_ready(h)
    ref = jet_lstm_reference(js, params)
    assert h.shape == (batch, nh, 1)
    # bf16 MXU operands in both paths -> loosened tolerance vs. a pure-f32 check.
    assert jnp.allclose(h, ref, atol=1e-2, rtol=1e-2), float(jnp.max(jnp.abs(h - ref)))

    # HCREnsemble combination of the three member nets' (c_score, q_score) outputs.
    nc, nq = 4, 3
    c_scores = jax.random.normal(k_c, (3, batch, nc), jnp.float32)
    q_scores = jax.random.normal(k_q, (3, batch, nq), jnp.float32)
    c_score, q_score = hcr_ensemble_combine(c_scores, q_scores)
    jax.block_until_ready((c_score, q_score))
    c_ref = jax.nn.softmax(jnp.mean(c_scores, axis=0), axis=-1)
    q_ref = jnp.mean(q_scores, axis=0)
    assert jnp.allclose(c_score, c_ref, atol=1e-4, rtol=1e-4)
    assert jnp.allclose(q_score, q_ref, atol=1e-4, rtol=1e-4)

    print("KERNEL_OK")
</pallas_src>

<mosaic_0001>
module attributes {stable_mosaic.version = 11 : i64} {
  func.func @jetlstm_kernel(%arg0: i32, %arg1: memref<2xi32, #tpu.memory_space<smem>>, %arg2: memref<1x128xi32, #tpu.memory_space<vmem>>, %arg3: memref<1x4x1024xbf16, #tpu.memory_space<vmem>>, %arg4: memref<128x4xbf16, #tpu.memory_space<vmem>>, %arg5: memref<128x32xbf16, #tpu.memory_space<vmem>>, %arg6: memref<128x1xf32, #tpu.memory_space<vmem>>, %arg7: memref<128x64xbf16, #tpu.memory_space<vmem>>, %arg8: memref<128x1xf32, #tpu.memory_space<vmem>>, %arg9: memref<32x128xf32, #tpu.memory_space<vmem>>, %arg10: memref<128x1024xf32, #tpu.memory_space<vmem>>, %arg11: memref<64x128xf32, #tpu.memory_space<vmem>>) attributes {dimension_semantics = [#tpu.dimension_semantics<parallel>], iteration_bounds = array<i64: 2>, scalar_prefetch = 1 : i64, scratch_operands = 2 : i64, tpu.core_type = #tpu.core_type<tc>, window_params = [{transform_indices = @transform_0, window_bounds = array<i64: 1, 128>}, {transform_indices = @transform_1, window_bounds = array<i64: 1, 4, 1024>}, {pipeline_mode = #tpu.pipeline_mode<synchronous>, transform_indices = @transform_2, window_bounds = array<i64: 128, 4>}, {pipeline_mode = #tpu.pipeline_mode<synchronous>, transform_indices = @transform_3, window_bounds = array<i64: 128, 32>}, {pipeline_mode = #tpu.pipeline_mode<synchronous>, transform_indices = @transform_4, window_bounds = array<i64: 128, 1>}, {pipeline_mode = #tpu.pipeline_mode<synchronous>, transform_indices = @transform_5, window_bounds = array<i64: 128, 64>}, {pipeline_mode = #tpu.pipeline_mode<synchronous>, transform_indices = @transform_6, window_bounds = array<i64: 128, 1>}, {transform_indices = @transform_7, window_bounds = array<i64: 32, 128>}]} {
    %0 = arith.index_cast %arg0 : i32 to index
    %1 = memref.load %arg1[%0] : memref<2xi32, #tpu.memory_space<smem>>
    %c0 = arith.constant 0 : index
    %c0_0 = arith.constant 0 : index
    %2 = vector.load %arg5[%c0, %c0_0] : memref<128x32xbf16, #tpu.memory_space<vmem>>, vector<128x32xbf16>
    %c0_1 = arith.constant 0 : index
    %c0_2 = arith.constant 0 : index
    %3 = vector.load %arg7[%c0_1, %c0_2] : memref<128x64xbf16, #tpu.memory_space<vmem>>, vector<128x64xbf16>
    %c0_3 = arith.constant 0 : index
    %c0_4 = arith.constant 0 : index
    %4 = vector.load %arg8[%c0_3, %c0_4] : memref<128x1xf32, #tpu.memory_space<vmem>>, vector<128x1xf32>
    %5 = vector.shape_cast %4 : vector<128x1xf32> to vector<128x1xf32>
    %6 = vector.broadcast %5 : vector<128x1xf32> to vector<128x128xf32>
    %c0_5 = arith.constant 0 : index
    %c0_6 = arith.constant 0 : index
    %7 = vector.load %arg2[%c0_5, %c0_6] : memref<1x128xi32, #tpu.memory_space<vmem>>, vector<1x128xi32>
    %8 = vector.shape_cast %7 : vector<1x128xi32> to vector<1x128xi32>
    %9 = vector.broadcast %8 : vector<1x128xi32> to vector<32x128xi32>
    %c0_7 = arith.constant 0 : index
    %c0_8 = arith.constant 0 : index
    %10 = vector.load %arg4[%c0_7, %c0_8] : memref<128x4xbf16, #tpu.memory_space<vmem>>, vector<128x4xbf16>
    %c0_9 = arith.constant 0 : index
    %c0_10 = arith.constant 0 : index
    %c0_11 = arith.constant 0 : index
    %11 = vector.load %arg3[%c0_9, %c0_10, %c0_11] : memref<1x4x1024xbf16, #tpu.memory_space<vmem>>, vector<1x4x1024xbf16>
    %12 = vector.shape_cast %11 : vector<1x4x1024xbf16> to vector<4x1024xbf16>
    %cst = arith.constant dense<0.000000e+00> : vector<128x1024xf32>
    %13 = tpu.matmul %10, %12, %cst {dimension_numbers = #tpu.dot_dimension_numbers<[1], [0], [0], [1], [0, 0, 1, 1], [], []>} : vector<128x4xbf16>, vector<4x1024xbf16>, vector<128x1024xf32> -> vector<128x1024xf32>
    %c0_12 = arith.constant 0 : index
    %c0_13 = arith.constant 0 : index
    %14 = vector.load %arg6[%c0_12, %c0_13] : memref<128x1xf32, #tpu.memory_space<vmem>>, vector<128x1xf32>
    %15 = vector.broadcast %14 : vector<128x1xf32> to vector<128x1024xf32>
    %16 = arith.addf %13, %15 : vector<128x1024xf32>
    %c0_14 = arith.constant 0 : index
    %c0_15 = arith.constant 0 : index
    %17 = vector.load %arg10[%c0_14, %c0_15] : memref<128x1024xf32, #tpu.memory_space<vmem>>, vector<128x1024xf32>
    tpu.vector_store %arg10[%c0_14, %c0_15], %16 {strides = array<i32>} : memref<128x1024xf32, #tpu.memory_space<vmem>>, vector<128x1024xf32>,
    %cst_16 = arith.constant 0.000000e+00 : f32
    %18 = vector.broadcast %cst_16 : f32 to vector<64x128xf32>
    %c0_17 = arith.constant 0 : index
    %c0_18 = arith.constant 0 : index
    %19 = vector.load %arg11[%c0_17, %c0_18] : memref<64x128xf32, #tpu.memory_space<vmem>>, vector<64x128xf32>
    tpu.vector_store %arg11[%c0_17, %c0_18], %18 {strides = array<i32>} : memref<64x128xf32, #tpu.memory_space<vmem>>, vector<64x128xf32>,
    %cst_19 = arith.constant 0.000000e+00 : f32
    %20 = vector.broadcast %cst_19 : f32 to vector<32x128xf32>
    %c0_20 = arith.constant 0 : index
    %c0_21 = arith.constant 0 : index
    %21 = vector.load %arg10[%c0_20, %c0_21] : memref<128x1024xf32, #tpu.memory_space<vmem>>, vector<128x128xf32>
    %c0_i32 = arith.constant 0 : i32
    %22 = arith.subi %1, %c0_i32 : i32
    %23 = arith.addi %c0_i32, %22 : i32
    %c1_i32 = arith.constant 1 : i32
    %24:4 = scf.for %arg12 = %c0_i32 to %23 step %c1_i32 iter_args(%arg13 = %20, %arg14 = %20, %arg15 = %20, %arg16 = %21) -> (vector<32x128xf32>, vector<32x128xf32>, vector<32x128xf32>, vector<128x128xf32>)  : i32 {
      %26 = vector.extract_strided_slice %arg16 {offsets = [0, 0], sizes = [32, 128], strides = [1, 1]} : vector<128x128xf32> to vector<32x128xf32>
      %cst_24 = arith.constant 5.000000e-01 : f32
      %27 = vector.broadcast %cst_24 : f32 to vector<32x128xf32>
      %28 = arith.mulf %27, %26 : vector<32x128xf32>
      %29 = math.tanh %28 : vector<32x128xf32>
      %cst_25 = arith.constant 5.000000e-01 : f32
      %30 = vector.broadcast %cst_25 : f32 to vector<32x128xf32>
      %31 = arith.mulf %30, %29 : vector<32x128xf32>
      %cst_26 = arith.constant 5.000000e-01 : f32
      %32 = vector.broadcast %cst_26 : f32 to vector<32x128xf32>
      %33 = arith.addf %31, %32 : vector<32x128xf32>
      %34 = vector.extract_strided_slice %arg16 {offsets = [32, 0], sizes = [32, 128], strides = [1, 1]} : vector<128x128xf32> to vector<32x128xf32>
      %cst_27 = arith.constant 5.000000e-01 : f32
      %35 = vector.broadcast %cst_27 : f32 to vector<32x128xf32>
      %36 = arith.mulf %35, %34 : vector<32x128xf32>
      %37 = math.tanh %36 : vector<32x128xf32>
      %cst_28 = arith.constant 5.000000e-01 : f32
      %38 = vector.broadcast %cst_28 : f32 to vector<32x128xf32>
      %39 = arith.mulf %38, %37 : vector<32x128xf32>
      %cst_29 = arith.constant 5.000000e-01 : f32
      %40 = vector.broadcast %cst_29 : f32 to vector<32x128xf32>
      %41 = arith.addf %39, %40 : vector<32x128xf32>
      %42 = vector.extract_strided_slice %arg16 {offsets = [64, 0], sizes = [32, 128], strides = [1, 1]} : vector<128x128xf32> to vector<32x128xf32>
      %43 = math.tanh %42 : vector<32x128xf32>
      %44 = vector.extract_strided_slice %arg16 {offsets = [96, 0], sizes = [32, 128], strides = [1, 1]} : vector<128x128xf32> to vector<32x128xf32>
      %cst_30 = arith.constant 5.000000e-01 : f32
      %45 = vector.broadcast %cst_30 : f32 to vector<32x128xf32>
      %46 = arith.mulf %45, %44 : vector<32x128xf32>
      %47 = math.tanh %46 : vector<32x128xf32>
      %cst_31 = arith.constant 5.000000e-01 : f32
      %48 = vector.broadcast %cst_31 : f32 to vector<32x128xf32>
      %49 = arith.mulf %48, %47 : vector<32x128xf32>
      %cst_32 = arith.constant 5.000000e-01 : f32
      %50 = vector.broadcast %cst_32 : f32 to vector<32x128xf32>
      %51 = arith.addf %49, %50 : vector<32x128xf32>
      %52 = arith.mulf %41, %arg13 : vector<32x128xf32>
      %53 = arith.mulf %33, %43 : vector<32x128xf32>
      %54 = arith.addf %52, %53 : vector<32x128xf32>
      %55 = math.tanh %54 : vector<32x128xf32>
      %56 = arith.mulf %51, %55 : vector<32x128xf32>
      %c0_33 = arith.constant 0 : index
      %c0_34 = arith.constant 0 : index
      %57 = vector.load %arg11[%c0_33, %c0_34] : memref<64x128xf32, #tpu.memory_space<vmem>>, vector<32x128xf32>
      tpu.vector_store %arg11[%c0_33, %c0_34], %56 {strides = array<i32>} : memref<64x128xf32, #tpu.memory_space<vmem>>, vector<32x128xf32>,
      %c1_i32_35 = arith.constant 1 : i32
      %58 = arith.addi %arg12, %c1_i32_35 : i32
      %c7_i32 = arith.constant 7 : i32
      %59 = arith.minsi %58, %c7_i32 : i32
      %c128_i32 = arith.constant 128 : i32
      %60 = arith.muli %59, %c128_i32 : i32
      %61 = tpu.assume_multiple %60, 128 : i32
      %c0_36 = arith.constant 0 : index
      %62 = arith.index_cast %61 : i32 to index
      %63 = vector.load %arg10[%c0_36, %62] : memref<128x1024xf32, #tpu.memory_space<vmem>>, vector<128x128xf32>
      %64 = arith.truncf %56 : vector<32x128xf32> to vector<32x128xbf16>
      %cst_37 = arith.constant dense<0.000000e+00> : vector<128x128xf32>
      %65 = tpu.matmul %2, %64, %cst_37 {dimension_numbers = #tpu.dot_dimension_numbers<[1], [0], [0], [1], [0, 0, 1, 1], [], []>} : vector<128x32xbf16>, vector<32x128xbf16>, vector<128x128xf32> -> vector<128x128xf32>
      %66 = arith.addf %63, %65 : vector<128x128xf32>
      %c0_38 = arith.constant 0 : index
      %c0_39 = arith.constant 0 : index
      %67 = vector.load %arg11[%c0_38, %c0_39] : memref<64x128xf32, #tpu.memory_space<vmem>>, vector<64x128xf32>
      %68 = arith.truncf %67 : vector<64x128xf32> to vector<64x128xbf16>
      %cst_40 = arith.constant dense<0.000000e+00> : vector<128x128xf32>
      %69 = tpu.matmul %3, %68, %cst_40 {dimension_numbers = #tpu.dot_dimension_numbers<[1], [0], [0], [1], [0, 0, 1, 1], [], []>} : vector<128x64xbf16>, vector<64x128xbf16>, vector<128x128xf32> -> vector<128x128xf32>
      %70 = arith.addf %69, %6 : vector<128x128xf32>
      %71 = vector.extract_strided_slice %70 {offsets = [0, 0], sizes = [32, 128], strides = [1, 1]} : vector<128x128xf32> to vector<32x128xf32>
      %cst_41 = arith.constant 5.000000e-01 : f32
      %72 = vector.broadcast %cst_41 : f32 to vector<32x128xf32>
      %73 = arith.mulf %72, %71 : vector<32x128xf32>
      %74 = math.tanh %73 : vector<32x128xf32>
      %cst_42 = arith.constant 5.000000e-01 : f32
      %75 = vector.broadcast %cst_42 : f32 to vector<32x128xf32>
      %76 = arith.mulf %75, %74 : vector<32x128xf32>
      %cst_43 = arith.constant 5.000000e-01 : f32
      %77 = vector.broadcast %cst_43 : f32 to vector<32x128xf32>
      %78 = arith.addf %76, %77 : vector<32x128xf32>
      %79 = vector.extract_strided_slice %70 {offsets = [32, 0], sizes = [32, 128], strides = [1, 1]} : vector<128x128xf32> to vector<32x128xf32>
      %cst_44 = arith.constant 5.000000e-01 : f32
      %80 = vector.broadcast %cst_44 : f32 to vector<32x128xf32>
      %81 = arith.mulf %80, %79 : vector<32x128xf32>
      %82 = math.tanh %81 : vector<32x128xf32>
      %cst_45 = arith.constant 5.000000e-01 : f32
      %83 = vector.broadcast %cst_45 : f32 to vector<32x128xf32>
      %84 = arith.mulf %83, %82 : vector<32x128xf32>
      %cst_46 = arith.constant 5.000000e-01 : f32
      %85 = vector.broadcast %cst_46 : f32 to vector<32x128xf32>
      %86 = arith.addf %84, %85 : vector<32x128xf32>
      %87 = vector.extract_strided_slice %70 {offsets = [64, 0], sizes = [32, 128], strides = [1, 1]} : vector<128x128xf32> to vector<32x128xf32>
      %88 = math.tanh %87 : vector<32x128xf32>
      %89 = vector.extract_strided_slice %70 {offsets = [96, 0], sizes = [32, 128], strides = [1, 1]} : vector<128x128xf32> to vector<32x128xf32>
      %cst_47 = arith.constant 5.000000e-01 : f32
      %90 = vector.broadcast %cst_47 : f32 to vector<32x128xf32>
      %91 = arith.mulf %90, %89 : vector<32x128xf32>
      %92 = math.tanh %91 : vector<32x128xf32>
      %cst_48 = arith.constant 5.000000e-01 : f32
      %93 = vector.broadcast %cst_48 : f32 to vector<32x128xf32>
      %94 = arith.mulf %93, %92 : vector<32x128xf32>
      %cst_49 = arith.constant 5.000000e-01 : f32
      %95 = vector.broadcast %cst_49 : f32 to vector<32x128xf32>
      %96 = arith.addf %94, %95 : vector<32x128xf32>
      %97 = arith.mulf %86, %arg14 : vector<32x128xf32>
      %98 = arith.mulf %78, %88 : vector<32x128xf32>
      %99 = arith.addf %97, %98 : vector<32x128xf32>
      %100 = math.tanh %99 : vector<32x128xf32>
      %101 = arith.mulf %96, %100 : vector<32x128xf32>
      %c32 = arith.constant 32 : index
      %c0_50 = arith.constant 0 : index
      %102 = vector.load %arg11[%c32, %c0_50] : memref<64x128xf32, #tpu.memory_space<vmem>>, vector<32x128xf32>
      tpu.vector_store %arg11[%c32, %c0_50], %101 {strides = array<i32>} : memref<64x128xf32, #tpu.memory_space<vmem>>, vector<32x128xf32>,
      %103 = vector.broadcast %arg12 : i32 to vector<32x128xi32>
      %104 = arith.cmpi eq, %9, %103 : vector<32x128xi32>
      %105 = arith.select %104, %101, %arg15 : vector<32x128xi1>, vector<32x128xf32>
      scf.yield %54, %99, %105, %66 : vector<32x128xf32>, vector<32x128xf32>, vector<32x128xf32>, vector<128x128xf32>
    }
    %c0_22 = arith.constant 0 : index
    %c0_23 = arith.constant 0 : index
    %25 = vector.load %arg9[%c0_22, %c0_23] : memref<32x128xf32, #tpu.memory_space<vmem>>, vector<32x128xf32>
    tpu.vector_store %arg9[%c0_22, %c0_23], %24#2 {strides = array<i32>} : memref<32x128xf32, #tpu.memory_space<vmem>>, vector<32x128xf32>,
    return
  }
  func.func @transform_0(%arg0: i32, %arg1: memref<2xi32, #tpu.memory_space<smem>>) -> (i32, i32) {
    %c0_i32 = arith.constant 0 : i32
    %c0_i32_0 = arith.constant 0 : i32
    return %c0_i32, %arg0 : i32, i32
  }
  func.func @transform_1(%arg0: i32, %arg1: memref<2xi32, #tpu.memory_space<smem>>) -> (i32, i32, i32) {
    %c0_i32 = arith.constant 0 : i32
    %c0_i32_0 = arith.constant 0 : i32
    %c0_i32_1 = arith.constant 0 : i32
    return %arg0, %c0_i32, %c0_i32_0 : i32, i32, i32
  }
  func.func @transform_2(%arg0: i32, %arg1: memref<2xi32, #tpu.memory_space<smem>>) -> (i32, i32) {
    %c0_i32 = arith.constant 0 : i32
    %c0_i32_0 = arith.constant 0 : i32
    %c0_i32_1 = arith.constant 0 : i32
    return %c0_i32, %c0_i32_0 : i32, i32
  }
  func.func @transform_3(%arg0: i32, %arg1: memref<2xi32, #tpu.memory_space<smem>>) -> (i32, i32) {
    %c0_i32 = arith.constant 0 : i32
    %c0_i32_0 = arith.constant 0 : i32
    %c0_i32_1 = arith.constant 0 : i32
    return %c0_i32, %c0_i32_0 : i32, i32
  }
  func.func @transform_4(%arg0: i32, %arg1: memref<2xi32, #tpu.memory_space<smem>>) -> (i32, i32) {
    %c0_i32 = arith.constant 0 : i32
    %c0_i32_0 = arith.constant 0 : i32
    %c0_i32_1 = arith.constant 0 : i32
    return %c0_i32, %c0_i32_0 : i32, i32
  }
  func.func @transform_5(%arg0: i32, %arg1: memref<2xi32, #tpu.memory_space<smem>>) -> (i32, i32) {
    %c0_i32 = arith.constant 0 : i32
    %c0_i32_0 = arith.constant 0 : i32
    %c0_i32_1 = arith.constant 0 : i32
    return %c0_i32, %c0_i32_0 : i32, i32
  }
  func.func @transform_6(%arg0: i32, %arg1: memref<2xi32, #tpu.memory_space<smem>>) -> (i32, i32) {
    %c0_i32 = arith.constant 0 : i32
    %c0_i32_0 = arith.constant 0 : i32
    %c0_i32_1 = arith.constant 0 : i32
    return %c0_i32, %c0_i32_0 : i32, i32
  }
  func.func @transform_7(%arg0: i32, %arg1: memref<2xi32, #tpu.memory_space<smem>>) -> (i32, i32) {
    %c0_i32 = arith.constant 0 : i32
    %c0_i32_0 = arith.constant 0 : i32
    return %c0_i32, %arg0 : i32, i32
  }
}

</mosaic_0001>

<llo_original>
// kernel: tpu_custom_call.1
$region0: #{tpu_custom_call.1}
  #allocation0 [shape = 'u32[]', space=smem, size = 0x4, offset = 0x4, fixed_abs, tag = 'smem constant byte address 0x4 - core index']
  #allocation1 [shape = 'u32[144,128]{1,0:T(1,128)}', space=vmem, size = 0x12000, scoped, tag = 'internal scratch']
  #allocation2 [shape = 'f32[128,1024]{1,0:T(8,128)}', space=vmem, size = 0x80000, scoped, tag = 'scratch operand']
  #allocation3 [shape = 'f32[64,128]{1,0:T(8,128)}', space=vmem, size = 0x8000, scoped, tag = 'scratch operand']
  #allocation4 [shape = 's32[1]{0}', space=sflag, size = 0x4, scoped, tag = 'scoped memory for tpu_custom_call.1']
  #allocation5 [shape = 'u8[512]{0}', space=smem, size = 0x200, scoped, tag = 'prefetched SMEM operand 0']
  %s0 = inlined_call_operand.vmem [shape: s32[2], index: 0, kind: input, shape index: {}]
  %s1 = inlined_call_operand.vmem [shape: s32[1,256], index: 1, kind: input, shape index: {}]
  %s2 = inlined_call_operand.vmem [shape: bf16[2,4,1024], index: 2, kind: input, shape index: {}]
  %s3 = inlined_call_operand.vmem [shape: bf16[128,4], index: 3, kind: input, shape index: {}]
  %s4 = inlined_call_operand.vmem [shape: bf16[128,32], index: 4, kind: input, shape index: {}]
  %s5 = inlined_call_operand.vmem [shape: f32[128,1], index: 5, kind: input, shape index: {}]
  %s6 = inlined_call_operand.vmem [shape: bf16[128,64], index: 6, kind: input, shape index: {}]
  %s7 = inlined_call_operand.vmem [shape: f32[128,1], index: 7, kind: input, shape index: {}]
  %s8 = inlined_call_operand.hbm [shape: f32[32,256], index: 8, kind: output, shape index: {}]
  %s9 = sld [smem:[#allocation0]]
  $region68: #{tpu_custom_call.1} parent=0
    _
  %s11 = ssub.s32 1, %s9
  %s12 = scalar_select 0, %s11, %s9
  %s13 = sshll.u32 %s0, 4
  %s14 = int_to_ptr.vmem [resolvable:$true] %s13
  %16 = dma.vmem_to_smem %s14, 16, [#allocation5], [#allocation4]
  %17 = dma.done [#allocation4], 16
  %18 = sfence
  $region1: #{tpu_custom_call.1} parent=0
    #allocation6 [shape = 'u8[32768]{0}', space=vmem, size = 0x8000, scoped, tag = 'output window, operand 0']
    #allocation7 [shape = 's32[2]{0}', space=sflag, size = 0x8, scoped, tag = 'scoped memory for tpu_custom_call.1']
    %19 = vsyncpa [#allocation7], 0
    %s20 = scalar_lea.sflag [#allocation7], 1
    %21 = vsyncpa %s20, 0
    loop: start=0, step=1, limit=4
    $region2: #{tpu_custom_call.1} parent=1 // loop_pre_header
      _
    $region3: #{tpu_custom_call.1} parent=1 // loop_header
      %s23 = sphi 0, %s27
      %p24 = scmp.ge.s32.totalorder %s23, 4
      %s33 = sphi 0, %s35
      %s36 = sphi 0, %s33
      %s37 = sphi 0, %s36
      %s53 = sphi 0, %s37
      %s59 = sphi 0, %s61
      %s62 = sphi 0, %s59
      %s63 = sphi 0, %s62
      %s79 = sphi 0, %s63
      %s83 = sphi 0, %s83
      %s85 = sphi 0, %s83
      %s86 = sphi 0, %s85
      %s100 = sphi 0, %s86
      %s104 = sphi 0, %s104
      %s106 = sphi 0, %s104
      %s107 = sphi 0, %s106
      %s121 = sphi 0, %s107
      %s125 = sphi 0, %s125
      %s127 = sphi 0, %s125
      %s128 = sphi 0, %s127
      %s142 = sphi 0, %s128
      %s146 = sphi 0, %s146
      %s148 = sphi 0, %s146
      %s149 = sphi 0, %s148
      %s163 = sphi 0, %s149
      %s167 = sphi 0, %s167
      %s169 = sphi 0, %s167
      %s170 = sphi 0, %s169
      %s184 = sphi 0, %s170
      %s190 = sphi 0, %s192
      %s193 = sphi 0, %s190
      %s194 = sphi 0, %s193
      %s210 = sphi 0, %s194
    $region4: #{tpu_custom_call.1} parent=1 // loop_header_branch
      %26 = sbr.rel (%p24) target = $region8
    $region5: #{tpu_custom_call.1} parent=1 // loop_body
      %s28 = ssub.s32 %s23, 1
      %s29 = ssub.s32 %s23, 2
      %s30 = sadd.s32 %s23, 1
      %s31 = ssub.s32 %s23, %s30
      %p32 = scmp.eq.s32.totalorder %s31, 0
      %s34 = sadd.s32 %s33, 1
      %s35 = scalar_select %p32, %s33, %s34
      %p38 = pneg %p32
      %p39 = scmp.eq.s32.totalorder %s23, 1
      %p40 = por %p38, %p39
      %p41 = scmp.ne.s32.totalorder %s33, %s36
      %p42 = scmp.eq.s32.totalorder %s23, 0
      %p43 = por %p41, %p42
      %p44 = scmp.ne.s32.totalorder %s33, %s36
      %p45 = scmp.eq.s32.totalorder %s28, 1
      %p46 = por %p44, %p45
      %p47 = scmp.ne.s32.totalorder %s36, %s37
      %p48 = scmp.eq.s32.totalorder %s28, 0
      %p49 = por %p47, %p48
      %p50 = scmp.ne.s32.totalorder %s36, %s37
      %p51 = scmp.eq.s32.totalorder %s29, 1
      %p52 = por %p50, %p51
      %p54 = scmp.ne.s32.totalorder %s37, %s53
      %p55 = scmp.eq.s32.totalorder %s29, 0
      %p56 = por %p54, %p55
      %s57 = ssub.s32 %s23, %s30
      %p58 = scmp.eq.s32.totalorder %s57, 0
      %s60 = sadd.s32 %s59, 1
      %s61 = scalar_select %p58, %s59, %s60
      %p64 = pneg %p58
      %p65 = scmp.eq.s32.totalorder %s23, 1
      %p66 = por %p64, %p65
      %p67 = scmp.ne.s32.totalorder %s59, %s62
      %p68 = scmp.eq.s32.totalorder %s23, 0
      %p69 = por %p67, %p68
      %p70 = scmp.ne.s32.totalorder %s59, %s62
      %p71 = scmp.eq.s32.totalorder %s28, 1
      %p72 = por %p70, %p71
      %p73 = scmp.ne.s32.totalorder %s62, %s63
      %p74 = scmp.eq.s32.totalorder %s28, 0
      %p75 = por %p73, %p74
      %p76 = scmp.ne.s32.totalorder %s62, %s63
      %p77 = scmp.eq.s32.totalorder %s29, 1
      %p78 = por %p76, %p77
      %p80 = scmp.ne.s32.totalorder %s63, %s79
      %p81 = scmp.eq.s32.totalorder %s29, 0
      %p82 = por %p80, %p81
      %s84 = sadd.s32 %s83, 1
      %p87 = scmp.eq.s32.totalorder %s23, 1
      %p88 = scmp.ne.s32.totalorder %s83, %s85
      %p89 = scmp.eq.s32.totalorder %s23, 0
      %p90 = por %p88, %p89
      %p91 = scmp.ne.s32.totalorder %s83, %s85
      %p92 = scmp.eq.s32.totalorder %s28, 1
      %p93 = por %p91, %p92
      %p94 = scmp.ne.s32.totalorder %s85, %s86
      %p95 = scmp.eq.s32.totalorder %s28, 0
      %p96 = por %p94, %p95
      %p97 = scmp.ne.s32.totalorder %s85, %s86
      %p98 = scmp.eq.s32.totalorder %s29, 1
      %p99 = por %p97, %p98
      %p101 = scmp.ne.s32.totalorder %s86, %s100
      %p102 = scmp.eq.s32.totalorder %s29, 0
      %p103 = por %p101, %p102
      %s105 = sadd.s32 %s104, 1
      %p108 = scmp.eq.s32.totalorder %s23, 1
      %p109 = scmp.ne.s32.totalorder %s104, %s106
      %p110 = scmp.eq.s32.totalorder %s23, 0
      %p111 = por %p109, %p110
      %p112 = scmp.ne.s32.totalorder %s104, %s106
      %p113 = scmp.eq.s32.totalorder %s28, 1
      %p114 = por %p112, %p113
      %p115 = scmp.ne.s32.totalorder %s106, %s107
      %p116 = scmp.eq.s32.totalorder %s28, 0
      %p117 = por %p115, %p116
      %p118 = scmp.ne.s32.totalorder %s106, %s107
      %p119 = scmp.eq.s32.totalorder %s29, 1
      %p120 = por %p118, %p119
      %p122 = scmp.ne.s32.totalorder %s107, %s121
      %p123 = scmp.eq.s32.totalorder %s29, 0
      %p124 = por %p122, %p123
      %s126 = sadd.s32 %s125, 1
      %p129 = scmp.eq.s32.totalorder %s23, 1
      %p130 = scmp.ne.s32.totalorder %s125, %s127
      %p131 = scmp.eq.s32.totalorder %s23, 0
      %p132 = por %p130, %p131
      %p133 = scmp.ne.s32.totalorder %s125, %s127
      %p134 = scmp.eq.s32.totalorder %s28, 1
      %p135 = por %p133, %p134
      %p136 = scmp.ne.s32.totalorder %s127, %s128
      %p137 = scmp.eq.s32.totalorder %s28, 0
      %p138 = por %p136, %p137
      %p139 = scmp.ne.s32.totalorder %s127, %s128
      %p140 = scmp.eq.s32.totalorder %s29, 1
      %p141 = por %p139, %p140
      %p143 = scmp.ne.s32.totalorder %s128, %s142
      %p144 = scmp.eq.s32.totalorder %s29, 0
      %p145 = por %p143, %p144
      %s147 = sadd.s32 %s146, 1
      %p150 = scmp.eq.s32.totalorder %s23, 1
      %p151 = scmp.ne.s32.totalorder %s146, %s148
      %p152 = scmp.eq.s32.totalorder %s23, 0
      %p153 = por %p151, %p152
      %p154 = scmp.ne.s32.totalorder %s146, %s148
      %p155 = scmp.eq.s32.totalorder %s28, 1
      %p156 = por %p154, %p155
      %p157 = scmp.ne.s32.totalorder %s148, %s149
      %p158 = scmp.eq.s32.totalorder %s28, 0
      %p159 = por %p157, %p158
      %p160 = scmp.ne.s32.totalorder %s148, %s149
      %p161 = scmp.eq.s32.totalorder %s29, 1
      %p162 = por %p160, %p161
      %p164 = scmp.ne.s32.totalorder %s149, %s163
      %p165 = scmp.eq.s32.totalorder %s29, 0
      %p166 = por %p164, %p165
      %s168 = sadd.s32 %s167, 1
      %p171 = scmp.eq.s32.totalorder %s23, 1
      %p172 = scmp.ne.s32.totalorder %s167, %s169
      %p173 = scmp.eq.s32.totalorder %s23, 0
      %p174 = por %p172, %p173
      %p175 = scmp.ne.s32.totalorder %s167, %s169
      %p176 = scmp.eq.s32.totalorder %s28, 1
      %p177 = por %p175, %p176
      %p178 = scmp.ne.s32.totalorder %s169, %s170
      %p179 = scmp.eq.s32.totalorder %s28, 0
      %p180 = por %p178, %p179
      %p181 = scmp.ne.s32.totalorder %s169, %s170
      %p182 = scmp.eq.s32.totalorder %s29, 1
      %p183 = por %p181, %p182
      %p185 = scmp.ne.s32.totalorder %s170, %s184
      %p186 = scmp.eq.s32.totalorder %s29, 0
      %p187 = por %p185, %p186
      %s188 = ssub.s32 %s23, %s30
      %p189 = scmp.eq.s32.totalorder %s188, 0
      %s191 = sadd.s32 %s190, 1
      %s192 = scalar_select %p189, %s190, %s191
      %p195 = pneg %p189
      %p196 = scmp.eq.s32.totalorder %s23, 1
      %p197 = por %p195, %p196
      %p198 = scmp.ne.s32.totalorder %s190, %s193
      %p199 = scmp.eq.s32.totalorder %s23, 0
      %p200 = por %p198, %p199
      %p201 = scmp.ne.s32.totalorder %s190, %s193
      %p202 = scmp.eq.s32.totalorder %s28, 1
      %p203 = por %p201, %p202
      %p204 = scmp.ne.s32.totalorder %s193, %s194
      %p205 = scmp.eq.s32.totalorder %s28, 0
      %p206 = por %p204, %p205
      %p207 = scmp.ne.s32.totalorder %s193, %s194
      %p208 = scmp.eq.s32.totalorder %s29, 1
      %p209 = por %p207, %p208
      %p211 = scmp.ne.s32.totalorder %s194, %s210
      %p212 = scmp.eq.s32.totalorder %s29, 0
      %p213 = por %p211, %p212
      %p214 = scmp.le.s32.totalorder 1, %s23
      %p215 = scmp.lt.s32.totalorder %s23, 3
      %p216 = pnand %p214, %p215
      %p217 = pneg %p216
      // Predicated region
      $region9: #{tpu_custom_call.1} parent=5 // pred_check
        _
      $region10: #{tpu_custom_call.1} parent=5 // pred_check_branch
        %219 = sbr.rel (%p216) target = $region12
      $region11: #{tpu_custom_call.1} parent=5 // pred_region
        %s220 = ssub.s32 %s23, 1
        // Predicated region
        $region13: #{tpu_custom_call.1} parent=11 // pred_check
          %p221 = pneg %p96
        $region14: #{tpu_custom_call.1} parent=11 // pred_check_branch
          %223 = sbr.rel (%p221) target = $region16
        $region15: #{tpu_custom_call.1} parent=11 // pred_region
          _
        $region16: #{tpu_custom_call.1} parent=11 // pred_fallthru
          _
        // Predicated region
        $region17: #{tpu_custom_call.1} parent=11 // pred_check
          %p224 = pneg %p117
        $region18: #{tpu_custom_call.1} parent=11 // pred_check_branch
          %226 = sbr.rel (%p224) target = $region20
        $region19: #{tpu_custom_call.1} parent=11 // pred_region
          _
        $region20: #{tpu_custom_call.1} parent=11 // pred_fallthru
          _
        // Predicated region
        $region21: #{tpu_custom_call.1} parent=11 // pred_check
          %p227 = pneg %p138
        $region22: #{tpu_custom_call.1} parent=11 // pred_check_branch
          %229 = sbr.rel (%p227) target = $region24
        $region23: #{tpu_custom_call.1} parent=11 // pred_region
          _
        $region24: #{tpu_custom_call.1} parent=11 // pred_fallthru
          _
        // Predicated region
        $region25: #{tpu_custom_call.1} parent=11 // pred_check
          %p230 = pneg %p159
        $region26: #{tpu_custom_call.1} parent=11 // pred_check_branch
          %232 = sbr.rel (%p230) target = $region28
        $region27: #{tpu_custom_call.1} parent=11 // pred_region
          _
        $region28: #{tpu_custom_call.1} parent=11 // pred_fallthru
          _
        // Predicated region
        $region29: #{tpu_custom_call.1} parent=11 // pred_check
          %p233 = pneg %p180
        $region30: #{tpu_custom_call.1} parent=11 // pred_check_branch
          %235 = sbr.rel (%p233) target = $region32
        $region31: #{tpu_custom_call.1} parent=11 // pred_region
          _
        $region32: #{tpu_custom_call.1} parent=11 // pred_fallthru
          _
      $region12: #{tpu_custom_call.1} parent=5 // pred_fallthru
        _
      %p236 = scmp.lt.s32.totalorder %s23, 2
      // Predicated region
      $region33: #{tpu_custom_call.1} parent=5 // pred_check
        %p237 = pneg %p236
      $region34: #{tpu_custom_call.1} parent=5 // pred_check_branch
        %239 = sbr.rel (%p237) target = $region36
      $region35: #{tpu_custom_call.1} parent=5 // pred_region
        // Predicated region
        $region37: #{tpu_custom_call.1} parent=35 // pred_check
          %p240 = pneg %p43
        $region38: #{tpu_custom_call.1} parent=35 // pred_check_branch
          %242 = sbr.rel (%p240) target = $region40
        $region39: #{tpu_custom_call.1} parent=35 // pred_region
          %p243 = scmp.lt.s32.totalorder %s23, 1
          %s244 = scalar_select %p243, %s23, 1
          %s245 = scalar_lea.vmem %s1, %s244
        $region40: #{tpu_custom_call.1} parent=35 // pred_fallthru
          _
        // Predicated region
        $region41: #{tpu_custom_call.1} parent=35 // pred_check
          %p246 = pneg %p69
        $region42: #{tpu_custom_call.1} parent=35 // pred_check_branch
          %248 = sbr.rel (%p246) target = $region44
        $region43: #{tpu_custom_call.1} parent=35 // pred_region
          %p249 = scmp.lt.s32.totalorder %s23, 1
          %s250 = scalar_select %p249, %s23, 1
          %s251 = smul.addr %s250, 8
          %s252 = smul.addr %s251, 2
          %s253 = scalar_lea.vmem %s2, %s252
        $region44: #{tpu_custom_call.1} parent=35 // pred_fallthru
          _
      $region36: #{tpu_custom_call.1} parent=5 // pred_fallthru
        _
      %p254 = scmp.le.s32.totalorder 1, %s23
      %p255 = scmp.lt.s32.totalorder %s23, 3
      %p256 = pnand %p254, %p255
      %p257 = pneg %p256
      // Predicated region
      $region45: #{tpu_custom_call.1} parent=5 // pred_check
        _
      $region46: #{tpu_custom_call.1} parent=5 // pred_check_branch
        %259 = sbr.rel (%p256) target = $region48
      $region47: #{tpu_custom_call.1} parent=5 // pred_region
        %s260 = ssub.s32 %s23, 1
        %p261 = scmp.lt.s32.totalorder %s28, 1
        %s262 = scalar_select %p261, %s28, 1
        %s263 = scalar_lea.vmem %s1, %s262
        %p264 = pneg %p49
        %p265 = pneg %p46
        %p266 = scmp.lt.s32.totalorder %s28, 1
        %s267 = scalar_select %p266, %s28, 1
        %s268 = smul.addr %s267, 8
        %s269 = smul.addr %s268, 2
        %s270 = scalar_lea.vmem %s2, %s269
        %p271 = pneg %p75
        %p272 = pneg %p72
        %p273 = pneg %p96
        %p274 = pneg %p93
        %p275 = pneg %p117
        %p276 = pneg %p114
        %p277 = pneg %p138
        %p278 = pneg %p135
        %p279 = pneg %p159
        %p280 = pneg %p156
        %p281 = pneg %p180
        %p282 = pneg %p177
        %p283 = pneg %p206
        %p284 = pneg %p203
        %s285 = sand.u32 %s193, 1
        %s286 = scalar_lea.sflag [#allocation7], %s285
        %s287 = sand.u32 %s193, 1
        %s288 = smul.addr %s287, 32
        %s289 = scalar_lea.vmem [#allocation6], %s288
        %p290 = scmp.lt.s32.totalorder %s28, 1
        %s291 = scalar_select %p290, %s28, 1
        %s292 = scalar_lea.vmem %s1, %s291
        %p293 = scmp.lt.s32.totalorder %s28, 1
        %s294 = scalar_select %p293, %s28, 1
        %s295 = smul.addr %s294, 8
        %s296 = smul.addr %s295, 2
        %s297 = scalar_lea.vmem %s2, %s296
        %s299 = sld [smem:[#allocation5 + %s28]]
        %v300 = vld [vmem:[%s4] sm:$0xf]
        %v301 = vld [vmem:[%s4 + $0x4] sm:$0xf]
        %v302 = vld [vmem:[%s4 + $0x8] sm:$0xf]
        %v303 = vld [vmem:[%s4 + $0xc] sm:$0xf]
        %v304 = vld [vmem:[%s4 + $0x10] sm:$0xf]
        %v305 = vld [vmem:[%s4 + $0x14] sm:$0xf]
        %v306 = vld [vmem:[%s4 + $0x18] sm:$0xf]
        %v307 = vld [vmem:[%s4 + $0x1c] sm:$0xf]
        %v308 = vld [vmem:[%s4 + $0x20] sm:$0xf]
        %v309 = vld [vmem:[%s4 + $0x24] sm:$0xf]
        %v310 = vld [vmem:[%s4 + $0x28] sm:$0xf]
        %v311 = vld [vmem:[%s4 + $0x2c] sm:$0xf]
        %v312 = vld [vmem:[%s4 + $0x30] sm:$0xf]
        %v313 = vld [vmem:[%s4 + $0x34] sm:$0xf]
        %v314 = vld [vmem:[%s4 + $0x38] sm:$0xf]
        %v315 = vld [vmem:[%s4 + $0x3c] sm:$0xf]
        %v316 = vld [vmem:[%s6] sm:$0xf]
        %v317 = vld [vmem:[%s6 + $0x4] sm:$0xf]
        %v318 = vld [vmem:[%s6 + $0x8] sm:$0xf]
        %v319 = vld [vmem:[%s6 + $0xc] sm:$0xf]
        %v320 = vld [vmem:[%s6 + $0x10] sm:$0xf]
        %v321 = vld [vmem:[%s6 + $0x14] sm:$0xf]
        %v322 = vld [vmem:[%s6 + $0x18] sm:$0xf]
        %v323 = vld [vmem:[%s6 + $0x1c] sm:$0xf]
        %v324 = vld [vmem:[%s6 + $0x20] sm:$0xf]
        %v325 = vld [vmem:[%s6 + $0x24] sm:$0xf]
        %v326 = vld [vmem:[%s6 + $0x28] sm:$0xf]
        %v327 = vld [vmem:[%s6 + $0x2c] sm:$0xf]
        %v328 = vld [vmem:[%s6 + $0x30] sm:$0xf]
        %v329 = vld [vmem:[%s6 + $0x34] sm:$0xf]
        %v330 = vld [vmem:[%s6 + $0x38] sm:$0xf]
        %v331 = vld [vmem:[%s6 + $0x3c] sm:$0xf]
        %v332 = vld [vmem:[%s7] sm:$0xff]
        %v333 = vld [vmem:[%s7 + $0x8] sm:$0xff]
        %v334 = vld [vmem:[%s7 + $0x10] sm:$0xff]
        %v335 = vld [vmem:[%s7 + $0x18] sm:$0xff]
        %v336 = vld [vmem:[%s7 + $0x20] sm:$0xff]
        %v337 = vld [vmem:[%s7 + $0x28] sm:$0xff]
        %v338 = vld [vmem:[%s7 + $0x30] sm:$0xff]
        %v339 = vld [vmem:[%s7 + $0x38] sm:$0xff]
        %v340 = vld [vmem:[%s7 + $0x40] sm:$0xff]
        %v341 = vld [vmem:[%s7 + $0x48] sm:$0xff]
        %v342 = vld [vmem:[%s7 + $0x50] sm:$0xff]
        %v343 = vld [vmem:[%s7 + $0x58] sm:$0xff]
        %v344 = vld [vmem:[%s7 + $0x60] sm:$0xff]
        %v345 = vld [vmem:[%s7 + $0x68] sm:$0xff]
        %v346 = vld [vmem:[%s7 + $0x70] sm:$0xff]
        %v347 = vld [vmem:[%s7 + $0x78] sm:$0xff]
        %349 = vset.pattern.permute.xlu0 0
        %350 = vperm.xlu0 %349, %v332
        %v351 = vpop.permute.xlu0 %350
        %354 = vset.pattern.permute.xlu0 0
        %355 = vperm.xlu0 %354, %v333
        %v356 = vpop.permute.xlu0 %355
        %359 = vset.pattern.permute.xlu0 0
        %360 = vperm.xlu0 %359, %v334
        %v361 = vpop.permute.xlu0 %360
        %364 = vset.pattern.permute.xlu0 0
        %365 = vperm.xlu0 %364, %v335
        %v366 = vpop.permute.xlu0 %365
        %369 = vset.pattern.permute.xlu0 0
        %370 = vperm.xlu0 %369, %v336
        %v371 = vpop.permute.xlu0 %370
        %374 = vset.pattern.permute.xlu0 0
        %375 = vperm.xlu0 %374, %v337
        %v376 = vpop.permute.xlu0 %375
        %379 = vset.pattern.permute.xlu0 0
        %380 = vperm.xlu0 %379, %v338
        %v381 = vpop.permute.xlu0 %380
        %384 = vset.pattern.permute.xlu0 0
        %385 = vperm.xlu0 %384, %v339
        %v386 = vpop.permute.xlu0 %385
        %389 = vset.pattern.permute.xlu0 0
        %390 = vperm.xlu0 %389, %v340
        %v391 = vpop.permute.xlu0 %390
        %394 = vset.pattern.permute.xlu0 0
        %395 = vperm.xlu0 %394, %v341
        %v396 = vpop.permute.xlu0 %395
        %399 = vset.pattern.permute.xlu0 0
        %400 = vperm.xlu0 %399, %v342
        %v401 = vpop.permute.xlu0 %400
        %404 = vset.pattern.permute.xlu0 0
        %405 = vperm.xlu0 %404, %v343
        %v406 = vpop.permute.xlu0 %405
        %409 = vset.pattern.permute.xlu0 0
        %410 = vperm.xlu0 %409, %v344
        %v411 = vpop.permute.xlu0 %410
        %414 = vset.pattern.permute.xlu0 0
        %415 = vperm.xlu0 %414, %v345
        %v416 = vpop.permute.xlu0 %415
        %419 = vset.pattern.permute.xlu0 0
        %420 = vperm.xlu0 %419, %v346
        %v421 = vpop.permute.xlu0 %420
        %424 = vset.pattern.permute.xlu0 0
        %425 = vperm.xlu0 %424, %v347
        %v426 = vpop.permute.xlu0 %425
        %v428 = vld [vmem:[%s292] sm:$0x1]
        %v429 = vlaneseq
        %v430 = vshrl.u32 %v429, 7
        %v431 = vsub.s32 0, %v430
        %v432 = vrot.slane %v428, %v431
        %v433 = vld [vmem:[%s3] sm:$0xf]
        %v434 = vld [vmem:[%s3 + $0x4] sm:$0xf]
        %v435 = vld [vmem:[%s3 + $0x8] sm:$0xf]
        %v436 = vld [vmem:[%s3 + $0xc] sm:$0xf]
        %v437 = vld [vmem:[%s3 + $0x10] sm:$0xf]
        %v438 = vld [vmem:[%s3 + $0x14] sm:$0xf]
        %v439 = vld [vmem:[%s3 + $0x18] sm:$0xf]
        %v440 = vld [vmem:[%s3 + $0x1c] sm:$0xf]
        %v441 = vld [vmem:[%s3 + $0x20] sm:$0xf]
        %v442 = vld [vmem:[%s3 + $0x24] sm:$0xf]
        %v443 = vld [vmem:[%s3 + $0x28] sm:$0xf]
        %v444 = vld [vmem:[%s3 + $0x2c] sm:$0xf]
        %v445 = vld [vmem:[%s3 + $0x30] sm:$0xf]
        %v446 = vld [vmem:[%s3 + $0x34] sm:$0xf]
        %v447 = vld [vmem:[%s3 + $0x38] sm:$0xf]
        %v448 = vld [vmem:[%s3 + $0x3c] sm:$0xf]
        %v449 = vld [vmem:[%s297] sm:$0xff]
        %v450 = vld [vmem:[%s297 + $0x8] sm:$0xff]
        %v451 = vld [vmem:[%s5] sm:$0xff]
        %v452 = vld [vmem:[%s5 + $0x8] sm:$0xff]
        %v453 = vld [vmem:[%s5 + $0x10] sm:$0xff]
        %v454 = vld [vmem:[%s5 + $0x18] sm:$0xff]
        %v455 = vld [vmem:[%s5 + $0x20] sm:$0xff]
        %v456 = vld [vmem:[%s5 + $0x28] sm:$0xff]
        %v457 = vld [vmem:[%s5 + $0x30] sm:$0xff]
        %v458 = vld [vmem:[%s5 + $0x38] sm:$0xff]
        %v459 = vld [vmem:[%s5 + $0x40] sm:$0xff]
        %v460 = vld [vmem:[%s5 + $0x48] sm:$0xff]
        %v461 = vld [vmem:[%s5 + $0x50] sm:$0xff]
        %v462 = vld [vmem:[%s5 + $0x58] sm:$0xff]
        %v463 = vld [vmem:[%s5 + $0x60] sm:$0xff]
        %v464 = vld [vmem:[%s5 + $0x68] sm:$0xff]
        %v465 = vld [vmem:[%s5 + $0x70] sm:$0xff]
        %v466 = vld [vmem:[%s5 + $0x78] sm:$0xff]
        %468 = vset.pattern.permute.xlu0 0
        %469 = vperm.xlu0 %468, %v451
        %v470 = vpop.permute.xlu0 %469
        %473 = vset.pattern.permute.xlu0 0
        %474 = vperm.xlu0 %473, %v452
        %v475 = vpop.permute.xlu0 %474
        %478 = vset.pattern.permute.xlu0 0
        %479 = vperm.xlu0 %478, %v453
        %v480 = vpop.permute.xlu0 %479
        %483 = vset.pattern.permute.xlu0 0
        %484 = vperm.xlu0 %483, %v454
        %v485 = vpop.permute.xlu0 %484
        %488 = vset.pattern.permute.xlu0 0
        %489 = vperm.xlu0 %488, %v455
        %v490 = vpop.permute.xlu0 %489
        %493 = vset.pattern.permute.xlu0 0
        %494 = vperm.xlu0 %493, %v456
        %v495 = vpop.permute.xlu0 %494
        %498 = vset.pattern.permute.xlu0 0
        %499 = vperm.xlu0 %498, %v457
        %v500 = vpop.permute.xlu0 %499
        %503 = vset.pattern.permute.xlu0 0
        %504 = vperm.xlu0 %503, %v458
        %v505 = vpop.permute.xlu0 %504
        %508 = vset.pattern.permute.xlu0 0
        %509 = vperm.xlu0 %508, %v459
        %v510 = vpop.permute.xlu0 %509
        %513 = vset.pattern.permute.xlu0 0
        %514 = vperm.xlu0 %513, %v460
        %v515 = vpop.permute.xlu0 %514
        %518 = vset.pattern.permute.xlu0 0
        %519 = vperm.xlu0 %518, %v461
        %v520 = vpop.permute.xlu0 %519
        %523 = vset.pattern.permute.xlu0 0
        %524 = vperm.xlu0 %523, %v462
        %v525 = vpop.permute.xlu0 %524
        %528 = vset.pattern.permute.xlu0 0
        %529 = vperm.xlu0 %528, %v463
        %v530 = vpop.permute.xlu0 %529
        %533 = vset.pattern.permute.xlu0 0
        %534 = vperm.xlu0 %533, %v464
        %v535 = vpop.permute.xlu0 %534
        %538 = vset.pattern.permute.xlu0 0
        %539 = vperm.xlu0 %538, %v465
        %v540 = vpop.permute.xlu0 %539
        %543 = vset.pattern.permute.xlu0 0
        %544 = vperm.xlu0 %543, %v466
        %v545 = vpop.permute.xlu0 %544
        %v563 = vunpack.c.l.b16 %v433
        %v564 = vunpack.c.l.b16 %v434
        %v565 = vunpack.c.l.b16 %v435
        %v566 = vunpack.c.l.b16 %v436
        %v567 = vunpack.c.l.b16 %v437
        %v568 = vunpack.c.l.b16 %v438
        %v569 = vunpack.c.l.b16 %v439
        %v570 = vunpack.c.l.b16 %v440
        %v571 = vunpack.c.l.b16 %v441
        %v572 = vunpack.c.l.b16 %v442
        %v573 = vunpack.c.l.b16 %v443
        %v574 = vunpack.c.l.b16 %v444
        %v575 = vunpack.c.l.b16 %v445
        %v576 = vunpack.c.l.b16 %v446
        %v577 = vunpack.c.l.b16 %v447
        %v578 = vunpack.c.l.b16 %v448
        %v579 = vpack.c.b16 %v564, %v563
        %v580 = vpack.c.b16 %v566, %v565
        %v581 = vpack.c.b16 %v568, %v567
        %v582 = vpack.c.b16 %v570, %v569
        %v583 = vpack.c.b16 %v572, %v571
        %v584 = vpack.c.b16 %v574, %v573
        %v585 = vpack.c.b16 %v576, %v575
        %v586 = vpack.c.b16 %v578, %v577
        %v589 = vcombine.high %v449, %v449
        %v591 = vunpack.c.l.s4 1983009808
        %v592 = vunpack.c.0.s8 %v591
        %v593 = vlaneseq
        %v594 = vshrl.u32 %v593, 7
        %v595 = vsub.s32 %v592, %v594
        %v596 = vrot.slane %v449, %v595
        %v598 = vunpack.c.l.s4 1983009808
        %v599 = vunpack.c.0.s8 %v598
        %v600 = vlaneseq
        %v601 = vshrl.u32 %v600, 7
        %v602 = vsub.s32 %v599, %v601
        %v603 = vrot.slane %v589, %v602
        %v604 = vcombine.high %v596, %v596
        %v605 = vcombine.high %v603, %v603
        %v606 = vcombine.high %v450, %v450
        %v608 = vunpack.c.l.s4 1983009808
        %v609 = vunpack.c.0.s8 %v608
        %v610 = vlaneseq
        %v611 = vshrl.u32 %v610, 7
        %v612 = vsub.s32 %v609, %v611
        %v613 = vrot.slane %v450, %v612
        %v615 = vunpack.c.l.s4 1983009808
        %v616 = vunpack.c.0.s8 %v615
        %v617 = vlaneseq
        %v618 = vshrl.u32 %v617, 7
        %v619 = vsub.s32 %v616, %v618
        %v620 = vrot.slane %v606, %v619
        %v621 = vcombine.high %v613, %v613
        %v622 = vcombine.high %v620, %v620
        %vm623 = vcmask 31744
        %v625 = vsel %vm623, %v579, 0
        %v628 = vsel %vm623, %v580, 0
        %v631 = vsel %vm623, %v581, 0
        %v634 = vsel %vm623, %v582, 0
        %v637 = vsel %vm623, %v583, 0
        %v640 = vsel %vm623, %v584, 0
        %v643 = vsel %vm623, %v585, 0
        %v646 = vsel %vm623, %v586, 0
        %vm648 = vcmask 1041408
        %v650 = vsel %vm648, %v596, 0
        %v653 = vsel %vm648, %v604, 0
        %v656 = vsel %vm648, %v603, 0
        %v659 = vsel %vm648, %v605, 0
        %v662 = vsel %vm648, %v613, 0
        %v665 = vsel %vm648, %v621, 0
        %v668 = vsel %vm648, %v620, 0
        %v671 = vsel %vm648, %v622, 0
        %673 = vmatprep.subr.bf16.mxu0 %v653
        %674 = vmatpush1.bf16.msra.mxu0 %v650
        %675 = vmatprep.subr.bf16.mxu0 0
        %676 = vmatpush1.bf16.msra.mxu0 0
        %677 = vmatprep.subr.bf16.mxu0 0
        %678 = vmatpush1.bf16.msra.mxu0 0
        %679 = vmatprep.subr.bf16.mxu0 0
        %680 = vmatpush1.bf16.msra.mxu0 0
        %681 = vmatprep.subr.bf16.mxu0 0
        %682 = vmatpush1.bf16.msra.mxu0 0
        %683 = vmatprep.subr.bf16.mxu0 0
        %684 = vmatpush1.bf16.msra.mxu0 0
        %685 = vmatprep.subr.bf16.mxu0 0
        %686 = vmatpush1.bf16.msra.mxu0 0
        %687 = vmatprep.subr.bf16.mxu0 0
        %688 = vmatpush1.bf16.msra.mxu0 0
        %689 = vmatprep.subr.bf16.mxu0 0
        %690 = vmatpush1.bf16.msra.mxu0 0
        %691 = vmatprep.subr.bf16.mxu0 0
        %692 = vmatpush1.bf16.msra.mxu0 0
        %693 = vmatprep.subr.bf16.mxu0 0
        %694 = vmatpush1.bf16.msra.mxu0 0
        %695 = vmatprep.subr.bf16.mxu0 0
        %696 = vmatpush1.bf16.msra.mxu0 0
        %697 = vmatprep.subr.bf16.mxu0 0
        %698 = vmatpush1.bf16.msra.mxu0 0
        %699 = vmatprep.subr.bf16.mxu0 0
        %700 = vmatpush1.bf16.msra.mxu0 0
        %701 = vmatprep.subr.bf16.mxu0 0
        %702 = vmatpush1.bf16.msra.mxu0 0
        %703 = vmatprep.subr.bf16.mxu0 0
        %704 = vmatpush1.bf16.msra.mxu0 0
        %705 = vmatprep.mubr.bf16.mxu0 0
        %706 = vmatmul.mubr.bf16.gmra.mrb[0].mxu0 %v625
        %v707 = vpop.f32.mrb[0].mxu0
        %v708 = vadd.f32 %v470, %v707
        %v709 = vpop.f32.mrb[0].mxu0
        %v710 = vadd.f32 %v470, %v709
        %v711 = vpop.f32.mrb[0].mxu0
        %v712 = vadd.f32 %v475, %v711
        %v713 = vpop.f32.mrb[0].mxu0
        %v714 = vadd.f32 %v475, %v713
        %715 = vmatprep.mubr.bf16.mxu0 0
        %716 = vmatmul.mubr.bf16.gmra.mrb[0].mxu0 %v628
        %v717 = vpop.f32.mrb[0].mxu0
        %v718 = vadd.f32 %v480, %v717
        %v719 = vpop.f32.mrb[0].mxu0
        %v720 = vadd.f32 %v480, %v719
        %v721 = vpop.f32.mrb[0].mxu0
        %v722 = vadd.f32 %v485, %v721
        %v723 = vpop.f32.mrb[0].mxu0
        %v724 = vadd.f32 %v485, %v723
        %725 = vmatprep.mubr.bf16.mxu0 0
        %726 = vmatmul.mubr.bf16.gmra.mrb[0].mxu0 %v631
        %v727 = vpop.f32.mrb[0].mxu0
        %v728 = vadd.f32 %v490, %v727
        %v729 = vpop.f32.mrb[0].mxu0
        %v730 = vadd.f32 %v490, %v729
        %v731 = vpop.f32.mrb[0].mxu0
        %v732 = vadd.f32 %v495, %v731
        %v733 = vpop.f32.mrb[0].mxu0
        %v734 = vadd.f32 %v495, %v733
        %735 = vmatprep.mubr.bf16.mxu0 0
        %736 = vmatmul.mubr.bf16.gmra.mrb[0].mxu0 %v634
        %v737 = vpop.f32.mrb[0].mxu0
        %v738 = vadd.f32 %v500, %v737
        %v739 = vpop.f32.mrb[0].mxu0
        %v740 = vadd.f32 %v500, %v739
        %v741 = vpop.f32.mrb[0].mxu0
        %v742 = vadd.f32 %v505, %v741
        %v743 = vpop.f32.mrb[0].mxu0
        %v744 = vadd.f32 %v505, %v743
        %745 = vmatprep.mubr.bf16.mxu0 0
        %746 = vmatmul.mubr.bf16.gmra.mrb[0].mxu0 %v637
        %v747 = vpop.f32.mrb[0].mxu0
        %v748 = vadd.f32 %v510, %v747
        %v749 = vpop.f32.mrb[0].mxu0
        %v750 = vadd.f32 %v510, %v749
        %v751 = vpop.f32.mrb[0].mxu0
        %v752 = vadd.f32 %v515, %v751
        %v753 = vpop.f32.mrb[0].mxu0
        %v754 = vadd.f32 %v515, %v753
        %755 = vmatprep.mubr.bf16.mxu0 0
        %756 = vmatmul.mubr.bf16.gmra.mrb[0].mxu0 %v640
        %v757 = vpop.f32.mrb[0].mxu0
        %v758 = vadd.f32 %v520, %v757
        %v759 = vpop.f32.mrb[0].mxu0
        %v760 = vadd.f32 %v520, %v759
        %v761 = vpop.f32.mrb[0].mxu0
        %v762 = vadd.f32 %v525, %v761
        %v763 = vpop.f32.mrb[0].mxu0
        %v764 = vadd.f32 %v525, %v763
        %765 = vmatprep.mubr.bf16.mxu0 0
        %766 = vmatmul.mubr.bf16.gmra.mrb[0].mxu0 %v643
        %v767 = vpop.f32.mrb[0].mxu0
        %v768 = vadd.f32 %v530, %v767
        %v769 = vpop.f32.mrb[0].mxu0
        %v770 = vadd.f32 %v530, %v769
        %v771 = vpop.f32.mrb[0].mxu0
        %v772 = vadd.f32 %v535, %v771
        %v773 = vpop.f32.mrb[0].mxu0
        %v774 = vadd.f32 %v535, %v773
        %775 = vmatprep.mubr.bf16.mxu0 0
        %776 = vmatmul.mubr.bf16.gmra.mrb[0].mxu0 %v646
        %v777 = vpop.f32.mrb[0].mxu0
        %v778 = vadd.f32 %v540, %v777
        %v779 = vpop.f32.mrb[0].mxu0
        %v780 = vadd.f32 %v540, %v779
        %v781 = vpop.f32.mrb[0].mxu0
        %v782 = vadd.f32 %v545, %v781
        %v783 = vpop.f32.mrb[0].mxu0
        %v784 = vadd.f32 %v545, %v783
        %785 = vdwg.mxu0
        %786 = vmatprep.subr.bf16.mxu0 %v659
        %787 = vmatpush1.bf16.msra.mxu0 %v656
        %788 = vmatprep.subr.bf16.mxu0 0
        %789 = vmatpush1.bf16.msra.mxu0 0
        %790 = vmatprep.subr.bf16.mxu0 0
        %791 = vmatpush1.bf16.msra.mxu0 0
        %792 = vmatprep.subr.bf16.mxu0 0
        %793 = vmatpush1.bf16.msra.mxu0 0
        %794 = vmatprep.subr.bf16.mxu0 0
        %795 = vmatpush1.bf16.msra.mxu0 0
        %796 = vmatprep.subr.bf16.mxu0 0
        %797 = vmatpush1.bf16.msra.mxu0 0
        %798 = vmatprep.subr.bf16.mxu0 0
        %799 = vmatpush1.bf16.msra.mxu0 0
        %800 = vmatprep.subr.bf16.mxu0 0
        %801 = vmatpush1.bf16.msra.mxu0 0
        %802 = vmatprep.subr.bf16.mxu0 0
        %803 = vmatpush1.bf16.msra.mxu0 0
        %804 = vmatprep.subr.bf16.mxu0 0
        %805 = vmatpush1.bf16.msra.mxu0 0
        %806 = vmatprep.subr.bf16.mxu0 0
        %807 = vmatpush1.bf16.msra.mxu0 0
        %808 = vmatprep.subr.bf16.mxu0 0
        %809 = vmatpush1.bf16.msra.mxu0 0
        %810 = vmatprep.subr.bf16.mxu0 0
        %811 = vmatpush1.bf16.msra.mxu0 0
        %812 = vmatprep.subr.bf16.mxu0 0
        %813 = vmatpush1.bf16.msra.mxu0 0
        %814 = vmatprep.subr.bf16.mxu0 0
        %815 = vmatpush1.bf16.msra.mxu0 0
        %816 = vmatprep.subr.bf16.mxu0 0
        %817 = vmatpush1.bf16.msra.mxu0 0
        %818 = vmatprep.mubr.bf16.mxu0 0
        %819 = vmatmul.mubr.bf16.gmra.mrb[0].mxu0 %v625
        %v820 = vpop.f32.mrb[0].mxu0
        %v821 = vadd.f32 %v470, %v820
        %v822 = vpop.f32.mrb[0].mxu0
        %v823 = vadd.f32 %v470, %v822
        %v824 = vpop.f32.mrb[0].mxu0
        %v825 = vadd.f32 %v475, %v824
        %v826 = vpop.f32.mrb[0].mxu0
        %v827 = vadd.f32 %v475, %v826
        %828 = vmatprep.mubr.bf16.mxu0 0
        %829 = vmatmul.mubr.bf16.gmra.mrb[0].mxu0 %v628
        %v830 = vpop.f32.mrb[0].mxu0
        %v831 = vadd.f32 %v480, %v830
        %v832 = vpop.f32.mrb[0].mxu0
        %v833 = vadd.f32 %v480, %v832
        %v834 = vpop.f32.mrb[0].mxu0
        %v835 = vadd.f32 %v485, %v834
        %v836 = vpop.f32.mrb[0].mxu0
        %v837 = vadd.f32 %v485, %v836
        %838 = vmatprep.mubr.bf16.mxu0 0
        %839 = vmatmul.mubr.bf16.gmra.mrb[0].mxu0 %v631
        %v840 = vpop.f32.mrb[0].mxu0
        %v841 = vadd.f32 %v490, %v840
        %v842 = vpop.f32.mrb[0].mxu0
        %v843 = vadd.f32 %v490, %v842
        %v844 = vpop.f32.mrb[0].mxu0
        %v845 = vadd.f32 %v495, %v844
        %v846 = vpop.f32.mrb[0].mxu0
        %v847 = vadd.f32 %v495, %v846
        %848 = vmatprep.mubr.bf16.mxu0 0
        %849 = vmatmul.mubr.bf16.gmra.mrb[0].mxu0 %v634
        %v850 = vpop.f32.mrb[0].mxu0
        %v851 = vadd.f32 %v500, %v850
        %v852 = vpop.f32.mrb[0].mxu0
        %v853 = vadd.f32 %v500, %v852
        %v854 = vpop.f32.mrb[0].mxu0
        %v855 = vadd.f32 %v505, %v854
        %v856 = vpop.f32.mrb[0].mxu0
        %v857 = vadd.f32 %v505, %v856
        %858 = vmatprep.mubr.bf16.mxu0 0
        %859 = vmatmul.mubr.bf16.gmra.mrb[0].mxu0 %v637
        %v860 = vpop.f32.mrb[0].mxu0
        %v861 = vadd.f32 %v510, %v860
        %v862 = vpop.f32.mrb[0].mxu0
        %v863 = vadd.f32 %v510, %v862
        %v864 = vpop.f32.mrb[0].mxu0
        %v865 = vadd.f32 %v515, %v864
        %v866 = vpop.f32.mrb[0].mxu0
        %v867 = vadd.f32 %v515, %v866
        %868 = vmatprep.mubr.bf16.mxu0 0
        %869 = vmatmul.mubr.bf16.gmra.mrb[0].mxu0 %v640
        %v870 = vpop.f32.mrb[0].mxu0
        %v871 = vadd.f32 %v520, %v870
        %v872 = vpop.f32.mrb[0].mxu0
        %v873 = vadd.f32 %v520, %v872
        %v874 = vpop.f32.mrb[0].mxu0
        %v875 = vadd.f32 %v525, %v874
        %v876 = vpop.f32.mrb[0].mxu0
        %v877 = vadd.f32 %v525, %v876
        %878 = vmatprep.mubr.bf16.mxu0 0
        %879 = vmatmul.mubr.bf16.gmra.mrb[0].mxu0 %v643
        %v880 = vpop.f32.mrb[0].mxu0
        %v881 = vadd.f32 %v530, %v880
        %v882 = vpop.f32.mrb[0].mxu0
        %v883 = vadd.f32 %v530, %v882
        %v884 = vpop.f32.mrb[0].mxu0
        %v885 = vadd.f32 %v535, %v884
        %v886 = vpop.f32.mrb[0].mxu0
        %v887 = vadd.f32 %v535, %v886
        %888 = vmatprep.mubr.bf16.mxu0 0
        %889 = vmatmul.mubr.bf16.gmra.mrb[0].mxu0 %v646
        %v890 = vpop.f32.mrb[0].mxu0
        %v891 = vadd.f32 %v540, %v890
        %v892 = vpop.f32.mrb[0].mxu0
        %v893 = vadd.f32 %v540, %v892
        %v894 = vpop.f32.mrb[0].mxu0
        %v895 = vadd.f32 %v545, %v894
        %v896 = vpop.f32.mrb[0].mxu0
        %v897 = vadd.f32 %v545, %v896
        %898 = vdwg.mxu0
        %899 = vmatprep.subr.bf16.mxu0 %v665
        %900 = vmatpush1.bf16.msra.mxu0 %v662
        %901 = vmatprep.subr.bf16.mxu0 0
        %902 = vmatpush1.bf16.msra.mxu0 0
        %903 = vmatprep.subr.bf16.mxu0 0
        %904 = vmatpush1.bf16.msra.mxu0 0
        %905 = vmatprep.subr.bf16.mxu0 0
        %906 = vmatpush1.bf16.msra.mxu0 0
        %907 = vmatprep.subr.bf16.mxu0 0
        %908 = vmatpush1.bf16.msra.mxu0 0
        %909 = vmatprep.subr.bf16.mxu0 0
        %910 = vmatpush1.bf16.msra.mxu0 0
        %911 = vmatprep.subr.bf16.mxu0 0
        %912 = vmatpush1.bf16.msra.mxu0 0
        %913 = vmatprep.subr.bf16.mxu0 0
        %914 = vmatpush1.bf16.msra.mxu0 0
        %915 = vmatprep.subr.bf16.mxu0 0
        %916 = vmatpush1.bf16.msra.mxu0 0
        %917 = vmatprep.subr.bf16.mxu0 0
        %918 = vmatpush1.bf16.msra.mxu0 0
        %919 = vmatprep.subr.bf16.mxu0 0
        %920 = vmatpush1.bf16.msra.mxu0 0
        %921 = vmatprep.subr.bf16.mxu0 0
        %922 = vmatpush1.bf16.msra.mxu0 0
        %923 = vmatprep.subr.bf16.mxu0 0
        %924 = vmatpush1.bf16.msra.mxu0 0
        %925 = vmatprep.subr.bf16.mxu0 0
        %926 = vmatpush1.bf16.msra.mxu0 0
        %927 = vmatprep.subr.bf16.mxu0 0
        %928 = vmatpush1.bf16.msra.mxu0 0
        %929 = vmatprep.subr.bf16.mxu0 0
        %930 = vmatpush1.bf16.msra.mxu0 0
        %931 = vmatprep.mubr.bf16.mxu0 0
        %932 = vmatmul.mubr.bf16.gmra.mrb[0].mxu0 %v625
        %v933 = vpop.f32.mrb[0].mxu0
        %v934 = vadd.f32 %v470, %v933
        %v935 = vpop.f32.mrb[0].mxu0
        %v936 = vadd.f32 %v470, %v935
        %v937 = vpop.f32.mrb[0].mxu0
        %v938 = vadd.f32 %v475, %v937
        %v939 = vpop.f32.mrb[0].mxu0
        %v940 = vadd.f32 %v475, %v939
        %941 = vmatprep.mubr.bf16.mxu0 0
        %942 = vmatmul.mubr.bf16.gmra.mrb[0].mxu0 %v628
        %v943 = vpop.f32.mrb[0].mxu0
        %v944 = vadd.f32 %v480, %v943
        %v945 = vpop.f32.mrb[0].mxu0
        %v946 = vadd.f32 %v480, %v945
        %v947 = vpop.f32.mrb[0].mxu0
        %v948 = vadd.f32 %v485, %v947
        %v949 = vpop.f32.mrb[0].mxu0
        %v950 = vadd.f32 %v485, %v949
        %951 = vmatprep.mubr.bf16.mxu0 0
        %952 = vmatmul.mubr.bf16.gmra.mrb[0].mxu0 %v631
        %v953 = vpop.f32.mrb[0].mxu0
        %v954 = vadd.f32 %v490, %v953
        %v955 = vpop.f32.mrb[0].mxu0
        %v956 = vadd.f32 %v490, %v955
        %v957 = vpop.f32.mrb[0].mxu0
        %v958 = vadd.f32 %v495, %v957
        %v959 = vpop.f32.mrb[0].mxu0
        %v960 = vadd.f32 %v495, %v959
        %961 = vmatprep.mubr.bf16.mxu0 0
        %962 = vmatmul.mubr.bf16.gmra.mrb[0].mxu0 %v634
        %v963 = vpop.f32.mrb[0].mxu0
        %v964 = vadd.f32 %v500, %v963
        %v965 = vpop.f32.mrb[0].mxu0
        %v966 = vadd.f32 %v500, %v965
        %v967 = vpop.f32.mrb[0].mxu0
        %v968 = vadd.f32 %v505, %v967
        %v969 = vpop.f32.mrb[0].mxu0
        %v970 = vadd.f32 %v505, %v969
        %971 = vmatprep.mubr.bf16.mxu0 0
        %972 = vmatmul.mubr.bf16.gmra.mrb[0].mxu0 %v637
        %v973 = vpop.f32.mrb[0].mxu0
        %v974 = vadd.f32 %v510, %v973
        %v975 = vpop.f32.mrb[0].mxu0
        %v976 = vadd.f32 %v510, %v975
        %v977 = vpop.f32.mrb[0].mxu0
        %v978 = vadd.f32 %v515, %v977
        %v979 = vpop.f32.mrb[0].mxu0
        %v980 = vadd.f32 %v515, %v979
        %981 = vmatprep.mubr.bf16.mxu0 0
        %982 = vmatmul.mubr.bf16.gmra.mrb[0].mxu0 %v640
        %v983 = vpop.f32.mrb[0].mxu0
        %v984 = vadd.f32 %v520, %v983
        %v985 = vpop.f32.mrb[0].mxu0
        %v986 = vadd.f32 %v520, %v985
        %v987 = vpop.f32.mrb[0].mxu0
        %v988 = vadd.f32 %v525, %v987
        %v989 = vpop.f32.mrb[0].mxu0
        %v990 = vadd.f32 %v525, %v989
        %991 = vmatprep.mubr.bf16.mxu0 0
        %992 = vmatmul.mubr.bf16.gmra.mrb[0].mxu0 %v643
        %v993 = vpop.f32.mrb[0].mxu0
        %v994 = vadd.f32 %v530, %v993
        %v995 = vpop.f32.mrb[0].mxu0
        %v996 = vadd.f32 %v530, %v995
        %v997 = vpop.f32.mrb[0].mxu0
        %v998 = vadd.f32 %v535, %v997
        %v999 = vpop.f32.mrb[0].mxu0
        %v1000 = vadd.f32 %v535, %v999
        %1001 = vmatprep.mubr.bf16.mxu0 0
        %1002 = vmatmul.mubr.bf16.gmra.mrb[0].mxu0 %v646
        %v1003 = vpop.f32.mrb[0].mxu0
        %v1004 = vadd.f32 %v540, %v1003
        %v1005 = vpop.f32.mrb[0].mxu0
        %v1006 = vadd.f32 %v540, %v1005
        %v1007 = vpop.f32.mrb[0].mxu0
        %v1008 = vadd.f32 %v545, %v1007
        %v1009 = vpop.f32.mrb[0].mxu0
        %v1010 = vadd.f32 %v545, %v1009
        %1011 = vdwg.mxu0
        %1012 = vmatprep.subr.bf16.mxu0 %v671
        %1013 = vmatpush1.bf16.msra.mxu0 %v668
        %1014 = vmatprep.subr.bf16.mxu0 0
        %1015 = vmatpush1.bf16.msra.mxu0 0
        %1016 = vmatprep.subr.bf16.mxu0 0
        %1017 = vmatpush1.bf16.msra.mxu0 0
        %1018 = vmatprep.subr.bf16.mxu0 0
        %1019 = vmatpush1.bf16.msra.mxu0 0
        %1020 = vmatprep.subr.bf16.mxu0 0
        %1021 = vmatpush1.bf16.msra.mxu0 0
        %1022 = vmatprep.subr.bf16.mxu0 0
        %1023 = vmatpush1.bf16.msra.mxu0 0
        %1024 = vmatprep.subr.bf16.mxu0 0
        %1025 = vmatpush1.bf16.msra.mxu0 0
        %1026 = vmatprep.subr.bf16.mxu0 0
        %1027 = vmatpush1.bf16.msra.mxu0 0
        %1028 = vmatprep.subr.bf16.mxu0 0
        %1029 = vmatpush1.bf16.msra.mxu0 0
        %1030 = vmatprep.subr.bf16.mxu0 0
        %1031 = vmatpush1.bf16.msra.mxu0 0
        %1032 = vmatprep.subr.bf16.mxu0 0
        %1033 = vmatpush1.bf16.msra.mxu0 0
        %1034 = vmatprep.subr.bf16.mxu0 0
        %1035 = vmatpush1.bf16.msra.mxu0 0
        %1036 = vmatprep.subr.bf16.mxu0 0
        %1037 = vmatpush1.bf16.msra.mxu0 0
        %1038 = vmatprep.subr.bf16.mxu0 0
        %1039 = vmatpush1.bf16.msra.mxu0 0
        %1040 = vmatprep.subr.bf16.mxu0 0
        %1041 = vmatpush1.bf16.msra.mxu0 0
        %1042 = vmatprep.subr.bf16.mxu0 0
        %1043 = vmatpush1.bf16.msra.mxu0 0
        %1044 = vmatprep.mubr.bf16.mxu0 0
        %1045 = vmatmul.mubr.bf16.gmra.mrb[0].mxu0 %v625
        %v1046 = vpop.f32.mrb[0].mxu0
        %v1047 = vadd.f32 %v470, %v1046
        %v1048 = vpop.f32.mrb[0].mxu0
        %v1049 = vadd.f32 %v470, %v1048
        %v1050 = vpop.f32.mrb[0].mxu0
        %v1051 = vadd.f32 %v475, %v1050
        %v1052 = vpop.f32.mrb[0].mxu0
        %v1053 = vadd.f32 %v475, %v1052
        %1054 = vmatprep.mubr.bf16.mxu0 0
        %1055 = vmatmul.mubr.bf16.gmra.mrb[0].mxu0 %v628
        %v1056 = vpop.f32.mrb[0].mxu0
        %v1057 = vadd.f32 %v480, %v1056
        %v1058 = vpop.f32.mrb[0].mxu0
        %v1059 = vadd.f32 %v480, %v1058
        %v1060 = vpop.f32.mrb[0].mxu0
        %v1061 = vadd.f32 %v485, %v1060
        %v1062 = vpop.f32.mrb[0].mxu0
        %v1063 = vadd.f32 %v485, %v1062
        %1064 = vmatprep.mubr.bf16.mxu0 0
        %1065 = vmatmul.mubr.bf16.gmra.mrb[0].mxu0 %v631
        %v1066 = vpop.f32.mrb[0].mxu0
        %v1067 = vadd.f32 %v490, %v1066
        %v1068 = vpop.f32.mrb[0].mxu0
        %v1069 = vadd.f32 %v490, %v1068
        %v1070 = vpop.f32.mrb[0].mxu0
        %v1071 = vadd.f32 %v495, %v1070
        %v1072 = vpop.f32.mrb[0].mxu0
        %v1073 = vadd.f32 %v495, %v1072
        %1074 = vmatprep.mubr.bf16.mxu0 0
        %1075 = vmatmul.mubr.bf16.gmra.mrb[0].mxu0 %v634
        %v1076 = vpop.f32.mrb[0].mxu0
        %v1077 = vadd.f32 %v500, %v1076
        %v1078 = vpop.f32.mrb[0].mxu0
        %v1079 = vadd.f32 %v500, %v1078
        %v1080 = vpop.f32.mrb[0].mxu0
        %v1081 = vadd.f32 %v505, %v1080
        %v1082 = vpop.f32.mrb[0].mxu0
        %v1083 = vadd.f32 %v505, %v1082
        %1084 = vmatprep.mubr.bf16.mxu0 0
        %1085 = vmatmul.mubr.bf16.gmra.mrb[0].mxu0 %v637
        %v1086 = vpop.f32.mrb[0].mxu0
        %v1087 = vadd.f32 %v510, %v1086
        %v1088 = vpop.f32.mrb[0].mxu0
        %v1089 = vadd.f32 %v510, %v1088
        %v1090 = vpop.f32.mrb[0].mxu0
        %v1091 = vadd.f32 %v515, %v1090
        %v1092 = vpop.f32.mrb[0].mxu0
        %v1093 = vadd.f32 %v515, %v1092
        %1094 = vmatprep.mubr.bf16.mxu0 0
        %1095 = vmatmul.mubr.bf16.gmra.mrb[0].mxu0 %v640
        %v1096 = vpop.f32.mrb[0].mxu0
        %v1097 = vadd.f32 %v520, %v1096
        %v1098 = vpop.f32.mrb[0].mxu0
        %v1099 = vadd.f32 %v520, %v1098
        %v1100 = vpop.f32.mrb[0].mxu0
        %v1101 = vadd.f32 %v525, %v1100
        %v1102 = vpop.f32.mrb[0].mxu0
        %v1103 = vadd.f32 %v525, %v1102
        %1104 = vmatprep.mubr.bf16.mxu0 0
        %1105 = vmatmul.mubr.bf16.gmra.mrb[0].mxu0 %v643
        %v1106 = vpop.f32.mrb[0].mxu0
        %v1107 = vadd.f32 %v530, %v1106
        %v1108 = vpop.f32.mrb[0].mxu0
        %v1109 = vadd.f32 %v530, %v1108
        %v1110 = vpop.f32.mrb[0].mxu0
        %v1111 = vadd.f32 %v535, %v1110
        %v1112 = vpop.f32.mrb[0].mxu0
        %v1113 = vadd.f32 %v535, %v1112
        %1114 = vmatprep.mubr.bf16.mxu0 0
        %1115 = vmatmul.mubr.bf16.gmra.mrb[0].mxu0 %v646
        %v1116 = vpop.f32.mrb[0].mxu0
        %v1117 = vadd.f32 %v540, %v1116
        %v1118 = vpop.f32.mrb[0].mxu0
        %v1119 = vadd.f32 %v540, %v1118
        %v1120 = vpop.f32.mrb[0].mxu0
        %v1121 = vadd.f32 %v545, %v1120
        %v1122 = vpop.f32.mrb[0].mxu0
        %v1123 = vadd.f32 %v545, %v1122
        %1124 = vdwg.mxu0
        %1125 = vst [vmem:[#allocation2] sm:$0xff] %v708
        %1126 = vst [vmem:[#allocation2 + $0x8] sm:$0xff] %v710
        %1127 = vst [vmem:[#allocation2 + $0x10] sm:$0xff] %v821
        %1128 = vst [vmem:[#allocation2 + $0x18] sm:$0xff] %v823
        %1129 = vst [vmem:[#allocation2 + $0x20] sm:$0xff] %v934
        %1130 = vst [vmem:[#allocation2 + $0x28] sm:$0xff] %v936
        %1131 = vst [vmem:[#allocation2 + $0x30] sm:$0xff] %v1047
        %1132 = vst [vmem:[#allocation2 + $0x38] sm:$0xff] %v1049
        %1133 = vst [vmem:[#allocation2 + $0x40] sm:$0xff] %v712
        %1134 = vst [vmem:[#allocation2 + $0x48] sm:$0xff] %v714
        %1135 = vst [vmem:[#allocation2 + $0x50] sm:$0xff] %v825
        %1136 = vst [vmem:[#allocation2 + $0x58] sm:$0xff] %v827
        %1137 = vst [vmem:[#allocation2 + $0x60] sm:$0xff] %v938
        %1138 = vst [vmem:[#allocation2 + $0x68] sm:$0xff] %v940
        %1139 = vst [vmem:[#allocation2 + $0x70] sm:$0xff] %v1051
        %1140 = vst [vmem:[#allocation2 + $0x78] sm:$0xff] %v1053
        %1141 = vst [vmem:[#allocation2 + $0x80] sm:$0xff] %v718
        %1142 = vst [vmem:[#allocation2 + $0x88] sm:$0xff] %v720
        %1143 = vst [vmem:[#allocation2 + $0x90] sm:$0xff] %v831
        %1144 = vst [vmem:[#allocation2 + $0x98] sm:$0xff] %v833
        %1145 = vst [vmem:[#allocation2 + $0xa0] sm:$0xff] %v944
        %1146 = vst [vmem:[#allocation2 + $0xa8] sm:$0xff] %v946
        %1147 = vst [vmem:[#allocation2 + $0xb0] sm:$0xff] %v1057
        %1148 = vst [vmem:[#allocation2 + $0xb8] sm:$0xff] %v1059
        %1149 = vst [vmem:[#allocation2 + $0xc0] sm:$0xff] %v722
        %1150 = vst [vmem:[#allocation2 + $0xc8] sm:$0xff] %v724
        %1151 = vst [vmem:[#allocation2 + $0xd0] sm:$0xff] %v835
        %1152 = vst [vmem:[#allocation2 + $0xd8] sm:$0xff] %v837
        %1153 = vst [vmem:[#allocation2 + $0xe0] sm:$0xff] %v948
        %1154 = vst [vmem:[#allocation2 + $0xe8] sm:$0xff] %v950
        %1155 = vst [vmem:[#allocation2 + $0xf0] sm:$0xff] %v1061
        %1156 = vst [vmem:[#allocation2 + $0xf8] sm:$0xff] %v1063
        %1157 = vst [vmem:[#allocation2 + $0x100] sm:$0xff] %v728
        %1158 = vst [vmem:[#allocation2 + $0x108] sm:$0xff] %v730
        %1159 = vst [vmem:[#allocation2 + $0x110] sm:$0xff] %v841
        %1160 = vst [vmem:[#allocation2 + $0x118] sm:$0xff] %v843
        %1161 = vst [vmem:[#allocation2 + $0x120] sm:$0xff] %v954
        %1162 = vst [vmem:[#allocation2 + $0x128] sm:$0xff] %v956
        %1163 = vst [vmem:[#allocation2 + $0x130] sm:$0xff] %v1067
        %1164 = vst [vmem:[#allocation2 + $0x138] sm:$0xff] %v1069
        %1165 = vst [vmem:[#allocation2 + $0x140] sm:$0xff] %v732
        %1166 = vst [vmem:[#allocation2 + $0x148] sm:$0xff] %v734
        %1167 = vst [vmem:[#allocation2 + $0x150] sm:$0xff] %v845
        %1168 = vst [vmem:[#allocation2 + $0x158] sm:$0xff] %v847
        %1169 = vst [vmem:[#allocation2 + $0x160] sm:$0xff] %v958
        %1170 = vst [vmem:[#allocation2 + $0x168] sm:$0xff] %v960
        %1171 = vst [vmem:[#allocation2 + $0x170] sm:$0xff] %v1071
        %1172 = vst [vmem:[#allocation2 + $0x178] sm:$0xff] %v1073
        %1173 = vst [vmem:[#allocation2 + $0x180] sm:$0xff] %v738
        %1174 = vst [vmem:[#allocation2 + $0x188] sm:$0xff] %v740
        %1175 = vst [vmem:[#allocation2 + $0x190] sm:$0xff] %v851
        %1176 = vst [vmem:[#allocation2 + $0x198] sm:$0xff] %v853
        %1177 = vst [vmem:[#allocation2 + $0x1a0] sm:$0xff] %v964
        %1178 = vst [vmem:[#allocation2 + $0x1a8] sm:$0xff] %v966
        %1179 = vst [vmem:[#allocation2 + $0x1b0] sm:$0xff] %v1077
        %1180 = vst [vmem:[#allocation2 + $0x1b8] sm:$0xff] %v1079
        %1181 = vst [vmem:[#allocation2 + $0x1c0] sm:$0xff] %v742
        %1182 = vst [vmem:[#allocation2 + $0x1c8] sm:$0xff] %v744
        %1183 = vst [vmem:[#allocation2 + $0x1d0] sm:$0xff] %v855
        %1184 = vst [vmem:[#allocation2 + $0x1d8] sm:$0xff] %v857
        %1185 = vst [vmem:[#allocation2 + $0x1e0] sm:$0xff] %v968
        %1186 = vst [vmem:[#allocation2 + $0x1e8] sm:$0xff] %v970
        %1187 = vst [vmem:[#allocation2 + $0x1f0] sm:$0xff] %v1081
        %1188 = vst [vmem:[#allocation2 + $0x1f8] sm:$0xff] %v1083
        %1189 = vst [vmem:[#allocation2 + $0x200] sm:$0xff] %v748
        %1190 = vst [vmem:[#allocation2 + $0x208] sm:$0xff] %v750
        %1191 = vst [vmem:[#allocation2 + $0x210] sm:$0xff] %v861
        %1192 = vst [vmem:[#allocation2 + $0x218] sm:$0xff] %v863
        %1193 = vst [vmem:[#allocation2 + $0x220] sm:$0xff] %v974
        %1194 = vst [vmem:[#allocation2 + $0x228] sm:$0xff] %v976
        %1195 = vst [vmem:[#allocation2 + $0x230] sm:$0xff] %v1087
        %1196 = vst [vmem:[#allocation2 + $0x238] sm:$0xff] %v1089
        %1197 = vst [vmem:[#allocation2 + $0x240] sm:$0xff] %v752
        %1198 = vst [vmem:[#allocation2 + $0x248] sm:$0xff] %v754
        %1199 = vst [vmem:[#allocation2 + $0x250] sm:$0xff] %v865
        %1200 = vst [vmem:[#allocation2 + $0x258] sm:$0xff] %v867
        %1201 = vst [vmem:[#allocation2 + $0x260] sm:$0xff] %v978
        %1202 = vst [vmem:[#allocation2 + $0x268] sm:$0xff] %v980
        %1203 = vst [vmem:[#allocation2 + $0x270] sm:$0xff] %v1091
        %1204 = vst [vmem:[#allocation2 + $0x278] sm:$0xff] %v1093
        %1205 = vst [vmem:[#allocation2 + $0x280] sm:$0xff] %v758
        %1206 = vst [vmem:[#allocation2 + $0x288] sm:$0xff] %v760
        %1207 = vst [vmem:[#allocation2 + $0x290] sm:$0xff] %v871
        %1208 = vst [vmem:[#allocation2 + $0x298] sm:$0xff] %v873
        %1209 = vst [vmem:[#allocation2 + $0x2a0] sm:$0xff] %v984
        %1210 = vst [vmem:[#allocation2 + $0x2a8] sm:$0xff] %v986
        %1211 = vst [vmem:[#allocation2 + $0x2b0] sm:$0xff] %v1097
        %1212 = vst [vmem:[#allocation2 + $0x2b8] sm:$0xff] %v1099
        %1213 = vst [vmem:[#allocation2 + $0x2c0] sm:$0xff] %v762
        %1214 = vst [vmem:[#allocation2 + $0x2c8] sm:$0xff] %v764
        %1215 = vst [vmem:[#allocation2 + $0x2d0] sm:$0xff] %v875
        %1216 = vst [vmem:[#allocation2 + $0x2d8] sm:$0xff] %v877
        %1217 = vst [vmem:[#allocation2 + $0x2e0] sm:$0xff] %v988
        %1218 = vst [vmem:[#allocation2 + $0x2e8] sm:$0xff] %v990
        %1219 = vst [vmem:[#allocation2 + $0x2f0] sm:$0xff] %v1101
        %1220 = vst [vmem:[#allocation2 + $0x2f8] sm:$0xff] %v1103
        %1221 = vst [vmem:[#allocation2 + $0x300] sm:$0xff] %v768
        %1222 = vst [vmem:[#allocation2 + $0x308] sm:$0xff] %v770
        %1223 = vst [vmem:[#allocation2 + $0x310] sm:$0xff] %v881
        %1224 = vst [vmem:[#allocation2 + $0x318] sm:$0xff] %v883
        %1225 = vst [vmem:[#allocation2 + $0x320] sm:$0xff] %v994
        %1226 = vst [vmem:[#allocation2 + $0x328] sm:$0xff] %v996
        %1227 = vst [vmem:[#allocation2 + $0x330] sm:$0xff] %v1107
        %1228 = vst [vmem:[#allocation2 + $0x338] sm:$0xff] %v1109
        %1229 = vst [vmem:[#allocation2 + $0x340] sm:$0xff] %v772
        %1230 = vst [vmem:[#allocation2 + $0x348] sm:$0xff] %v774
        %1231 = vst [vmem:[#allocation2 + $0x350] sm:$0xff] %v885
        %1232 = vst [vmem:[#allocation2 + $0x358] sm:$0xff] %v887
        %1233 = vst [vmem:[#allocation2 + $0x360] sm:$0xff] %v998
        %1234 = vst [vmem:[#allocation2 + $0x368] sm:$0xff] %v1000
        %1235 = vst [vmem:[#allocation2 + $0x370] sm:$0xff] %v1111
        %1236 = vst [vmem:[#allocation2 + $0x378] sm:$0xff] %v1113
        %1237 = vst [vmem:[#allocation2 + $0x380] sm:$0xff] %v778
        %1238 = vst [vmem:[#allocation2 + $0x388] sm:$0xff] %v780
        %1239 = vst [vmem:[#allocation2 + $0x390] sm:$0xff] %v891
        %1240 = vst [vmem:[#allocation2 + $0x398] sm:$0xff] %v893
        %1241 = vst [vmem:[#allocation2 + $0x3a0] sm:$0xff] %v1004
        %1242 = vst [vmem:[#allocation2 + $0x3a8] sm:$0xff] %v1006
        %1243 = vst [vmem:[#allocation2 + $0x3b0] sm:$0xff] %v1117
        %1244 = vst [vmem:[#allocation2 + $0x3b8] sm:$0xff] %v1119
        %1245 = vst [vmem:[#allocation2 + $0x3c0] sm:$0xff] %v782
        %1246 = vst [vmem:[#allocation2 + $0x3c8] sm:$0xff] %v784
        %1247 = vst [vmem:[#allocation2 + $0x3d0] sm:$0xff] %v895
        %1248 = vst [vmem:[#allocation2 + $0x3d8] sm:$0xff] %v897
        %1249 = vst [vmem:[#allocation2 + $0x3e0] sm:$0xff] %v1008
        %1250 = vst [vmem:[#allocation2 + $0x3e8] sm:$0xff] %v1010
        %1251 = vst [vmem:[#allocation2 + $0x3f0] sm:$0xff] %v1121
        %1252 = vst [vmem:[#allocation2 + $0x3f8] sm:$0xff] %v1123
        %1253 = vst [vmem:[#allocation3] sm:$0xff] 0.0
        %1254 = vst [vmem:[#allocation3 + $0x8] sm:$0xff] 0.0
        %1255 = vst [vmem:[#allocation3 + $0x10] sm:$0xff] 0.0
        %1256 = vst [vmem:[#allocation3 + $0x18] sm:$0xff] 0.0
        %1257 = vst [vmem:[#allocation3 + $0x20] sm:$0xff] 0.0
        %1258 = vst [vmem:[#allocation3 + $0x28] sm:$0xff] 0.0
        %1259 = vst [vmem:[#allocation3 + $0x30] sm:$0xff] 0.0
        %1260 = vst [vmem:[#allocation3 + $0x38] sm:$0xff] 0.0
        %v1261 = vld [vmem:[#allocation2] sm:$0xff]
        %v1262 = vld [vmem:[#allocation2 + $0x40] sm:$0xff]
        %v1263 = vld [vmem:[#allocation2 + $0x80] sm:$0xff]
        %v1264 = vld [vmem:[#allocation2 + $0xc0] sm:$0xff]
        %v1265 = vld [vmem:[#allocation2 + $0x100] sm:$0xff]
        %v1266 = vld [vmem:[#allocation2 + $0x140] sm:$0xff]
        %v1267 = vld [vmem:[#allocation2 + $0x180] sm:$0xff]
        %v1268 = vld [vmem:[#allocation2 + $0x1c0] sm:$0xff]
        %v1269 = vld [vmem:[#allocation2 + $0x200] sm:$0xff]
        %v1270 = vld [vmem:[#allocation2 + $0x240] sm:$0xff]
        %v1271 = vld [vmem:[#allocation2 + $0x280] sm:$0xff]
        %v1272 = vld [vmem:[#allocation2 + $0x2c0] sm:$0xff]
        %v1273 = vld [vmem:[#allocation2 + $0x300] sm:$0xff]
        %v1274 = vld [vmem:[#allocation2 + $0x340] sm:$0xff]
        %v1275 = vld [vmem:[#allocation2 + $0x380] sm:$0xff]
        %v1276 = vld [vmem:[#allocation2 + $0x3c0] sm:$0xff]
        // While loop
        $region49: #{tpu_custom_call.1} parent=47 // loop_pre_header
          _
        $region50: #{tpu_custom_call.1} parent=47 // loop_header
          %s1278 = sphi 0, %s1280
          %p1279 = scmp.ge.s32.totalorder %s1278, %s299
          %v1283 = vphi 0.0, %v1371
          %v1284 = vphi 0.0, %v1372
          %v1285 = vphi 0.0, %v1373
          %v1286 = vphi 0.0, %v1374
          %v1287 = vphi 0.0, %v1825
          %v1288 = vphi 0.0, %v1826
          %v1289 = vphi 0.0, %v1827
          %v1290 = vphi 0.0, %v1828
          %v1291 = vphi 0.0, %v1843
          %v1292 = vphi 0.0, %v1844
          %v1293 = vphi 0.0, %v1845
          %v1294 = vphi 0.0, %v1846
          %v1295 = vphi %v1261, %v1575
          %v1296 = vphi %v1262, %v1576
          %v1297 = vphi %v1263, %v1577
          %v1298 = vphi %v1264, %v1578
          %v1299 = vphi %v1265, %v1579
          %v1300 = vphi %v1266, %v1580
          %v1301 = vphi %v1267, %v1581
          %v1302 = vphi %v1268, %v1582
          %v1303 = vphi %v1269, %v1583
          %v1304 = vphi %v1270, %v1584
          %v1305 = vphi %v1271, %v1585
          %v1306 = vphi %v1272, %v1586
          %v1307 = vphi %v1273, %v1587
          %v1308 = vphi %v1274, %v1588
          %v1309 = vphi %v1275, %v1589
          %v1310 = vphi %v1276, %v1590
        $region51: #{tpu_custom_call.1} parent=47 // loop_header_branch
          %1282 = sbr.rel (%p1279) target = $region55
        $region52: #{tpu_custom_call.1} parent=47 // loop_body
          %v1311 = vmul.f32 %v1295, 0.5
          %v1312 = vmul.f32 %v1296, 0.5
          %v1313 = vmul.f32 %v1297, 0.5
          %v1314 = vmul.f32 %v1298, 0.5
          %v1315 = vtanh.pop %v1311
          %v1316 = vtanh.pop %v1312
          %v1317 = vtanh.pop %v1313
          %v1318 = vtanh.pop %v1314
          %v1319 = vmul.f32 %v1315, 0.5
          %v1320 = vmul.f32 %v1316, 0.5
          %v1321 = vmul.f32 %v1317, 0.5
          %v1322 = vmul.f32 %v1318, 0.5
          %v1323 = vadd.f32 %v1319, 0.5
          %v1324 = vadd.f32 %v1320, 0.5
          %v1325 = vadd.f32 %v1321, 0.5
          %v1326 = vadd.f32 %v1322, 0.5
          %v1327 = vmul.f32 %v1299, 0.5
          %v1328 = vmul.f32 %v1300, 0.5
          %v1329 = vmul.f32 %v1301, 0.5
          %v1330 = vmul.f32 %v1302, 0.5
          %v1331 = vtanh.pop %v1327
          %v1332 = vtanh.pop %v1328
          %v1333 = vtanh.pop %v1329
          %v1334 = vtanh.pop %v1330
          %v1335 = vmul.f32 %v1331, 0.5
          %v1336 = vmul.f32 %v1332, 0.5
          %v1337 = vmul.f32 %v1333, 0.5
          %v1338 = vmul.f32 %v1334, 0.5
          %v1339 = vadd.f32 %v1335, 0.5
          %v1340 = vadd.f32 %v1336, 0.5
          %v1341 = vadd.f32 %v1337, 0.5
          %v1342 = vadd.f32 %v1338, 0.5
          %v1343 = vtanh.pop %v1303
          %v1344 = vtanh.pop %v1304
          %v1345 = vtanh.pop %v1305
          %v1346 = vtanh.pop %v1306
          %v1347 = vmul.f32 %v1307, 0.5
          %v1348 = vmul.f32 %v1308, 0.5
          %v1349 = vmul.f32 %v1309, 0.5
          %v1350 = vmul.f32 %v1310, 0.5
          %v1351 = vtanh.pop %v1347
          %v1352 = vtanh.pop %v1348
          %v1353 = vtanh.pop %v1349
          %v1354 = vtanh.pop %v1350
          %v1355 = vmul.f32 %v1351, 0.5
          %v1356 = vmul.f32 %v1352, 0.5
          %v1357 = vmul.f32 %v1353, 0.5
          %v1358 = vmul.f32 %v1354, 0.5
          %v1359 = vadd.f32 %v1355, 0.5
          %v1360 = vadd.f32 %v1356, 0.5
          %v1361 = vadd.f32 %v1357, 0.5
          %v1362 = vadd.f32 %v1358, 0.5
          %v1363 = vmul.f32 %v1339, %v1283
          %v1364 = vmul.f32 %v1340, %v1284
          %v1365 = vmul.f32 %v1341, %v1285
          %v1366 = vmul.f32 %v1342, %v1286
          %v1367 = vmul.f32 %v1323, %v1343
          %v1368 = vmul.f32 %v1324, %v1344
          %v1369 = vmul.f32 %v1325, %v1345
          %v1370 = vmul.f32 %v1326, %v1346
          %v1371 = vadd.f32 %v1363, %v1367
          %v1372 = vadd.f32 %v1364, %v1368
          %v1373 = vadd.f32 %v1365, %v1369
          %v1374 = vadd.f32 %v1366, %v1370
          %v1375 = vtanh.pop %v1371
          %v1376 = vtanh.pop %v1372
          %v1377 = vtanh.pop %v1373
          %v1378 = vtanh.pop %v1374
          %v1379 = vmul.f32 %v1359, %v1375
          %v1380 = vmul.f32 %v1360, %v1376
          %v1381 = vmul.f32 %v1361, %v1377
          %v1382 = vmul.f32 %v1362, %v1378
          %1383 = vst [vmem:[#allocation3] sm:$0xff] %v1379
          %1384 = vst [vmem:[#allocation3 + $0x8] sm:$0xff] %v1380
          %1385 = vst [vmem:[#allocation3 + $0x10] sm:$0xff] %v1381
          %1386 = vst [vmem:[#allocation3 + $0x18] sm:$0xff] %v1382
          %s1387 = sadd.s32 %s1278, 1
          %p1388 = scmp.lt.s32.totalorder %s1387, 7
          %s1389 = scalar_select %p1388, %s1387, 7
          %s1390 = smul.u32 %s1389, 128
          %s1391 = sshra.s32 %s1390, 7
          %s1392 = sand.u32 %s1390, 127
          %s1393 = smul.addr %s1391, 8
          %s1394 = scalar_lea.vmem [#allocation2], %s1393
          %v1395 = vld [vmem:[%s1394] sm:$0xff]
          %v1396 = vld [vmem:[%s1394 + $0x40] sm:$0xff]
          %v1397 = vld [vmem:[%s1394 + $0x80] sm:$0xff]
          %v1398 = vld [vmem:[%s1394 + $0xc0] sm:$0xff]
          %v1399 = vld [vmem:[%s1394 + $0x100] sm:$0xff]
          %v1400 = vld [vmem:[%s1394 + $0x140] sm:$0xff]
          %v1401 = vld [vmem:[%s1394 + $0x180] sm:$0xff]
          %v1402 = vld [vmem:[%s1394 + $0x1c0] sm:$0xff]
          %v1403 = vld [vmem:[%s1394 + $0x200] sm:$0xff]
          %v1404 = vld [vmem:[%s1394 + $0x240] sm:$0xff]
          %v1405 = vld [vmem:[%s1394 + $0x280] sm:$0xff]
          %v1406 = vld [vmem:[%s1394 + $0x2c0] sm:$0xff]
          %v1407 = vld [vmem:[%s1394 + $0x300] sm:$0xff]
          %v1408 = vld [vmem:[%s1394 + $0x340] sm:$0xff]
          %v1409 = vld [vmem:[%s1394 + $0x380] sm:$0xff]
          %v1410 = vld [vmem:[%s1394 + $0x3c0] sm:$0xff]
          %v1411 = vpack.c.bf16 %v1380, %v1379
          %v1412 = vpack.c.bf16 %v1382, %v1381
          %v1429 = vunpack.c.l.b16 %v300
          %v1430 = vunpack.c.l.b16 %v301
          %v1431 = vunpack.c.l.b16 %v302
          %v1432 = vunpack.c.l.b16 %v303
          %v1433 = vunpack.c.l.b16 %v304
          %v1434 = vunpack.c.l.b16 %v305
          %v1435 = vunpack.c.l.b16 %v306
          %v1436 = vunpack.c.l.b16 %v307
          %v1437 = vunpack.c.l.b16 %v308
          %v1438 = vunpack.c.l.b16 %v309
          %v1439 = vunpack.c.l.b16 %v310
          %v1440 = vunpack.c.l.b16 %v311
          %v1441 = vunpack.c.l.b16 %v312
          %v1442 = vunpack.c.l.b16 %v313
          %v1443 = vunpack.c.l.b16 %v314
          %v1444 = vunpack.c.l.b16 %v315
          %v1445 = vpack.c.b16 %v1430, %v1429
          %v1446 = vpack.c.b16 %v1432, %v1431
          %v1447 = vpack.c.b16 %v1434, %v1433
          %v1448 = vpack.c.b16 %v1436, %v1435
          %v1449 = vpack.c.b16 %v1438, %v1437
          %v1450 = vpack.c.b16 %v1440, %v1439
          %v1451 = vpack.c.b16 %v1442, %v1441
          %v1452 = vpack.c.b16 %v1444, %v1443
          %vm1453 = vcmask 261120
          %v1455 = vsel %vm1453, %v1445, 0
          %v1458 = vsel %vm1453, %v1446, 0
          %v1461 = vsel %vm1453, %v1447, 0
          %v1464 = vsel %vm1453, %v1448, 0
          %v1467 = vsel %vm1453, %v1449, 0
          %v1470 = vsel %vm1453, %v1450, 0
          %v1473 = vsel %vm1453, %v1451, 0
          %v1476 = vsel %vm1453, %v1452, 0
          %1478 = vmatprep.subr.bf16.mxu0 0
          %1479 = vmatpush1.bf16.msra.mxu0 %v1411
          %1480 = vmatprep.subr.bf16.mxu0 0
          %1481 = vmatpush1.bf16.msra.mxu0 %v1412
          %1482 = vmatprep.subr.bf16.mxu0 0
          %1483 = vmatpush1.bf16.msra.mxu0 0
          %1484 = vmatprep.subr.bf16.mxu0 0
          %1485 = vmatpush1.bf16.msra.mxu0 0
          %1486 = vmatprep.subr.bf16.mxu0 0
          %1487 = vmatpush1.bf16.msra.mxu0 0
          %1488 = vmatprep.subr.bf16.mxu0 0
          %1489 = vmatpush1.bf16.msra.mxu0 0
          %1490 = vmatprep.subr.bf16.mxu0 0
          %1491 = vmatpush1.bf16.msra.mxu0 0
          %1492 = vmatprep.subr.bf16.mxu0 0
          %1493 = vmatpush1.bf16.msra.mxu0 0
          %1494 = vmatprep.subr.bf16.mxu0 0
          %1495 = vmatpush1.bf16.msra.mxu0 0
          %1496 = vmatprep.subr.bf16.mxu0 0
          %1497 = vmatpush1.bf16.msra.mxu0 0
          %1498 = vmatprep.subr.bf16.mxu0 0
          %1499 = vmatpush1.bf16.msra.mxu0 0
          %1500 = vmatprep.subr.bf16.mxu0 0
          %1501 = vmatpush1.bf16.msra.mxu0 0
          %1502 = vmatprep.subr.bf16.mxu0 0
          %1503 = vmatpush1.bf16.msra.mxu0 0
          %1504 = vmatprep.subr.bf16.mxu0 0
          %1505 = vmatpush1.bf16.msra.mxu0 0
          %1506 = vmatprep.subr.bf16.mxu0 0
          %1507 = vmatpush1.bf16.msra.mxu0 0
          %1508 = vmatprep.subr.bf16.mxu0 0
          %1509 = vmatpush1.bf16.msra.mxu0 0
          %1510 = vmatprep.mubr.bf16.mxu0 0
          %1511 = vmatmul.mubr.bf16.gmra.mrb[0].mxu0 %v1455
          %v1512 = vpop.f32.mrb[0].mxu0
          %v1513 = vadd.f32 0.0, %v1512
          %v1514 = vpop.f32.mrb[0].mxu0
          %v1515 = vpop.f32.mrb[0].mxu0
          %v1516 = vadd.f32 0.0, %v1515
          %v1517 = vpop.f32.mrb[0].mxu0
          %1518 = vmatprep.mubr.bf16.mxu0 0
          %1519 = vmatmul.mubr.bf16.gmra.mrb[0].mxu0 %v1458
          %v1520 = vpop.f32.mrb[0].mxu0
          %v1521 = vadd.f32 0.0, %v1520
          %v1522 = vpop.f32.mrb[0].mxu0
          %v1523 = vpop.f32.mrb[0].mxu0
          %v1524 = vadd.f32 0.0, %v1523
          %v1525 = vpop.f32.mrb[0].mxu0
          %1526 = vmatprep.mubr.bf16.mxu0 0
          %1527 = vmatmul.mubr.bf16.gmra.mrb[0].mxu0 %v1461
          %v1528 = vpop.f32.mrb[0].mxu0
          %v1529 = vadd.f32 0.0, %v1528
          %v1530 = vpop.f32.mrb[0].mxu0
          %v1531 = vpop.f32.mrb[0].mxu0
          %v1532 = vadd.f32 0.0, %v1531
          %v1533 = vpop.f32.mrb[0].mxu0
          %1534 = vmatprep.mubr.bf16.mxu0 0
          %1535 = vmatmul.mubr.bf16.gmra.mrb[0].mxu0 %v1464
          %v1536 = vpop.f32.mrb[0].mxu0
          %v1537 = vadd.f32 0.0, %v1536
          %v1538 = vpop.f32.mrb[0].mxu0
          %v1539 = vpop.f32.mrb[0].mxu0
          %v1540 = vadd.f32 0.0, %v1539
          %v1541 = vpop.f32.mrb[0].mxu0
          %1542 = vmatprep.mubr.bf16.mxu0 0
          %1543 = vmatmul.mubr.bf16.gmra.mrb[0].mxu0 %v1467
          %v1544 = vpop.f32.mrb[0].mxu0
          %v1545 = vadd.f32 0.0, %v1544
          %v1546 = vpop.f32.mrb[0].mxu0
          %v1547 = vpop.f32.mrb[0].mxu0
          %v1548 = vadd.f32 0.0, %v1547
          %v1549 = vpop.f32.mrb[0].mxu0
          %1550 = vmatprep.mubr.bf16.mxu0 0
          %1551 = vmatmul.mubr.bf16.gmra.mrb[0].mxu0 %v1470
          %v1552 = vpop.f32.mrb[0].mxu0
          %v1553 = vadd.f32 0.0, %v1552
          %v1554 = vpop.f32.mrb[0].mxu0
          %v1555 = vpop.f32.mrb[0].mxu0
          %v1556 = vadd.f32 0.0, %v1555
          %v1557 = vpop.f32.mrb[0].mxu0
          %1558 = vmatprep.mubr.bf16.mxu0 0
          %1559 = vmatmul.mubr.bf16.gmra.mrb[0].mxu0 %v1473
          %v1560 = vpop.f32.mrb[0].mxu0
          %v1561 = vadd.f32 0.0, %v1560
          %v1562 = vpop.f32.mrb[0].mxu0
          %v1563 = vpop.f32.mrb[0].mxu0
          %v1564 = vadd.f32 0.0, %v1563
          %v1565 = vpop.f32.mrb[0].mxu0
          %1566 = vmatprep.mubr.bf16.mxu0 0
          %1567 = vmatmul.mubr.bf16.gmra.mrb[0].mxu0 %v1476
          %v1568 = vpop.f32.mrb[0].mxu0
          %v1569 = vadd.f32 0.0, %v1568
          %v1570 = vpop.f32.mrb[0].mxu0
          %v1571 = vpop.f32.mrb[0].mxu0
          %v1572 = vadd.f32 0.0, %v1571
          %v1573 = vpop.f32.mrb[0].mxu0
          %1574 = vdwg.mxu0
          %v1575 = vadd.f32 %v1395, %v1513
          %v1576 = vadd.f32 %v1396, %v1516
          %v1577 = vadd.f32 %v1397, %v1521
          %v1578 = vadd.f32 %v1398, %v1524
          %v1579 = vadd.f32 %v1399, %v1529
          %v1580 = vadd.f32 %v1400, %v1532
          %v1581 = vadd.f32 %v1401, %v1537
          %v1582 = vadd.f32 %v1402, %v1540
          %v1583 = vadd.f32 %v1403, %v1545
          %v1584 = vadd.f32 %v1404, %v1548
          %v1585 = vadd.f32 %v1405, %v1553
          %v1586 = vadd.f32 %v1406, %v1556
          %v1587 = vadd.f32 %v1407, %v1561
          %v1588 = vadd.f32 %v1408, %v1564
          %v1589 = vadd.f32 %v1409, %v1569
          %v1590 = vadd.f32 %v1410, %v1572
          %v1591 = vld [vmem:[#allocation3] sm:$0xff]
          %v1592 = vld [vmem:[#allocation3 + $0x8] sm:$0xff]
          %v1593 = vld [vmem:[#allocation3 + $0x10] sm:$0xff]
          %v1594 = vld [vmem:[#allocation3 + $0x18] sm:$0xff]
          %v1595 = vld [vmem:[#allocation3 + $0x20] sm:$0xff]
          %v1596 = vld [vmem:[#allocation3 + $0x28] sm:$0xff]
          %v1597 = vld [vmem:[#allocation3 + $0x30] sm:$0xff]
          %v1598 = vld [vmem:[#allocation3 + $0x38] sm:$0xff]
          %v1599 = vpack.c.bf16 %v1592, %v1591
          %v1600 = vpack.c.bf16 %v1594, %v1593
          %v1601 = vpack.c.bf16 %v1596, %v1595
          %v1602 = vpack.c.bf16 %v1598, %v1597
          %v1619 = vunpack.c.l.b16 %v316
          %v1620 = vunpack.c.l.b16 %v317
          %v1621 = vunpack.c.l.b16 %v318
          %v1622 = vunpack.c.l.b16 %v319
          %v1623 = vunpack.c.l.b16 %v320
          %v1624 = vunpack.c.l.b16 %v321
          %v1625 = vunpack.c.l.b16 %v322
          %v1626 = vunpack.c.l.b16 %v323
          %v1627 = vunpack.c.l.b16 %v324
          %v1628 = vunpack.c.l.b16 %v325
          %v1629 = vunpack.c.l.b16 %v326
          %v1630 = vunpack.c.l.b16 %v327
          %v1631 = vunpack.c.l.b16 %v328
          %v1632 = vunpack.c.l.b16 %v329
          %v1633 = vunpack.c.l.b16 %v330
          %v1634 = vunpack.c.l.b16 %v331
          %v1635 = vpack.c.b16 %v1620, %v1619
          %v1636 = vpack.c.b16 %v1622, %v1621
          %v1637 = vpack.c.b16 %v1624, %v1623
          %v1638 = vpack.c.b16 %v1626, %v1625
          %v1639 = vpack.c.b16 %v1628, %v1627
          %v1640 = vpack.c.b16 %v1630, %v1629
          %v1641 = vpack.c.b16 %v1632, %v1631
          %v1642 = vpack.c.b16 %v1634, %v1633
          %vm1643 = vcmask 523264
          %v1645 = vsel %vm1643, %v1635, 0
          %v1648 = vsel %vm1643, %v1636, 0
          %v1651 = vsel %vm1643, %v1637, 0
          %v1654 = vsel %vm1643, %v1638, 0
          %v1657 = vsel %vm1643, %v1639, 0
          %v1660 = vsel %vm1643, %v1640, 0
          %v1663 = vsel %vm1643, %v1641, 0
          %v1666 = vsel %vm1643, %v1642, 0
          %1668 = vmatprep.subr.bf16.mxu0 0
          %1669 = vmatpush1.bf16.msra.mxu0 %v1599
          %1670 = vmatprep.subr.bf16.mxu0 0
          %1671 = vmatpush1.bf16.msra.mxu0 %v1600
          %1672 = vmatprep.subr.bf16.mxu0 0
          %1673 = vmatpush1.bf16.msra.mxu0 %v1601
          %1674 = vmatprep.subr.bf16.mxu0 0
          %1675 = vmatpush1.bf16.msra.mxu0 %v1602
          %1676 = vmatprep.subr.bf16.mxu0 0
          %1677 = vmatpush1.bf16.msra.mxu0 0
          %1678 = vmatprep.subr.bf16.mxu0 0
          %1679 = vmatpush1.bf16.msra.mxu0 0
          %1680 = vmatprep.subr.bf16.mxu0 0
          %1681 = vmatpush1.bf16.msra.mxu0 0
          %1682 = vmatprep.subr.bf16.mxu0 0
          %1683 = vmatpush1.bf16.msra.mxu0 0
          %1684 = vmatprep.subr.bf16.mxu0 0
          %1685 = vmatpush1.bf16.msra.mxu0 0
          %1686 = vmatprep.subr.bf16.mxu0 0
          %1687 = vmatpush1.bf16.msra.mxu0 0
          %1688 = vmatprep.subr.bf16.mxu0 0
          %1689 = vmatpush1.bf16.msra.mxu0 0
          %1690 = vmatprep.subr.bf16.mxu0 0
          %1691 = vmatpush1.bf16.msra.mxu0 0
          %1692 = vmatprep.subr.bf16.mxu0 0
          %1693 = vmatpush1.bf16.msra.mxu0 0
          %1694 = vmatprep.subr.bf16.mxu0 0
          %1695 = vmatpush1.bf16.msra.mxu0 0
          %1696 = vmatprep.subr.bf16.mxu0 0
          %1697 = vmatpush1.bf16.msra.mxu0 0
          %1698 = vmatprep.subr.bf16.mxu0 0
          %1699 = vmatpush1.bf16.msra.mxu0 0
          %1700 = vmatprep.mubr.bf16.mxu0 0
          %1701 = vmatmul.mubr.bf16.gmra.mrb[0].mxu0 %v1645
          %v1702 = vpop.f32.mrb[0].mxu0
          %v1703 = vadd.f32 %v351, %v1702
          %v1704 = vpop.f32.mrb[0].mxu0
          %v1705 = vpop.f32.mrb[0].mxu0
          %v1706 = vadd.f32 %v356, %v1705
          %v1707 = vpop.f32.mrb[0].mxu0
          %1708 = vmatprep.mubr.bf16.mxu0 0
          %1709 = vmatmul.mubr.bf16.gmra.mrb[0].mxu0 %v1648
          %v1710 = vpop.f32.mrb[0].mxu0
          %v1711 = vadd.f32 %v361, %v1710
          %v1712 = vpop.f32.mrb[0].mxu0
          %v1713 = vpop.f32.mrb[0].mxu0
          %v1714 = vadd.f32 %v366, %v1713
          %v1715 = vpop.f32.mrb[0].mxu0
          %1716 = vmatprep.mubr.bf16.mxu0 0
          %1717 = vmatmul.mubr.bf16.gmra.mrb[0].mxu0 %v1651
          %v1718 = vpop.f32.mrb[0].mxu0
          %v1719 = vadd.f32 %v371, %v1718
          %v1720 = vpop.f32.mrb[0].mxu0
          %v1721 = vpop.f32.mrb[0].mxu0
          %v1722 = vadd.f32 %v376, %v1721
          %v1723 = vpop.f32.mrb[0].mxu0
          %1724 = vmatprep.mubr.bf16.mxu0 0
          %1725 = vmatmul.mubr.bf16.gmra.mrb[0].mxu0 %v1654
          %v1726 = vpop.f32.mrb[0].mxu0
          %v1727 = vadd.f32 %v381, %v1726
          %v1728 = vpop.f32.mrb[0].mxu0
          %v1729 = vpop.f32.mrb[0].mxu0
          %v1730 = vadd.f32 %v386, %v1729
          %v1731 = vpop.f32.mrb[0].mxu0
          %1732 = vmatprep.mubr.bf16.mxu0 0
          %1733 = vmatmul.mubr.bf16.gmra.mrb[0].mxu0 %v1657
          %v1734 = vpop.f32.mrb[0].mxu0
          %v1735 = vadd.f32 %v391, %v1734
          %v1736 = vpop.f32.mrb[0].mxu0
          %v1737 = vpop.f32.mrb[0].mxu0
          %v1738 = vadd.f32 %v396, %v1737
          %v1739 = vpop.f32.mrb[0].mxu0
          %1740 = vmatprep.mubr.bf16.mxu0 0
          %1741 = vmatmul.mubr.bf16.gmra.mrb[0].mxu0 %v1660
          %v1742 = vpop.f32.mrb[0].mxu0
          %v1743 = vadd.f32 %v401, %v1742
          %v1744 = vpop.f32.mrb[0].mxu0
          %v1745 = vpop.f32.mrb[0].mxu0
          %v1746 = vadd.f32 %v406, %v1745
          %v1747 = vpop.f32.mrb[0].mxu0
          %1748 = vmatprep.mubr.bf16.mxu0 0
          %1749 = vmatmul.mubr.bf16.gmra.mrb[0].mxu0 %v1663
          %v1750 = vpop.f32.mrb[0].mxu0
          %v1751 = vadd.f32 %v411, %v1750
          %v1752 = vpop.f32.mrb[0].mxu0
          %v1753 = vpop.f32.mrb[0].mxu0
          %v1754 = vadd.f32 %v416, %v1753
          %v1755 = vpop.f32.mrb[0].mxu0
          %1756 = vmatprep.mubr.bf16.mxu0 0
          %1757 = vmatmul.mubr.bf16.gmra.mrb[0].mxu0 %v1666
          %v1758 = vpop.f32.mrb[0].mxu0
          %v1759 = vadd.f32 %v421, %v1758
          %v1760 = vpop.f32.mrb[0].mxu0
          %v1761 = vpop.f32.mrb[0].mxu0
          %v1762 = vadd.f32 %v426, %v1761
          %v1763 = vpop.f32.mrb[0].mxu0
          %1764 = vdwg.mxu0
          %v1765 = vmul.f32 %v1703, 0.5
          %v1766 = vmul.f32 %v1706, 0.5
          %v1767 = vmul.f32 %v1711, 0.5
          %v1768 = vmul.f32 %v1714, 0.5
          %v1769 = vtanh.pop %v1765
          %v1770 = vtanh.pop %v1766
          %v1771 = vtanh.pop %v1767
          %v1772 = vtanh.pop %v1768
          %v1773 = vmul.f32 %v1769, 0.5
          %v1774 = vmul.f32 %v1770, 0.5
          %v1775 = vmul.f32 %v1771, 0.5
          %v1776 = vmul.f32 %v1772, 0.5
          %v1777 = vadd.f32 %v1773, 0.5
          %v1778 = vadd.f32 %v1774, 0.5
          %v1779 = vadd.f32 %v1775, 0.5
          %v1780 = vadd.f32 %v1776, 0.5
          %v1781 = vmul.f32 %v1719, 0.5
          %v1782 = vmul.f32 %v1722, 0.5
          %v1783 = vmul.f32 %v1727, 0.5
          %v1784 = vmul.f32 %v1730, 0.5
          %v1785 = vtanh.pop %v1781
          %v1786 = vtanh.pop %v1782
          %v1787 = vtanh.pop %v1783
          %v1788 = vtanh.pop %v1784
          %v1789 = vmul.f32 %v1785, 0.5
          %v1790 = vmul.f32 %v1786, 0.5
          %v1791 = vmul.f32 %v1787, 0.5
          %v1792 = vmul.f32 %v1788, 0.5
          %v1793 = vadd.f32 %v1789, 0.5
          %v1794 = vadd.f32 %v1790, 0.5
          %v1795 = vadd.f32 %v1791, 0.5
          %v1796 = vadd.f32 %v1792, 0.5
          %v1797 = vtanh.pop %v1735
          %v1798 = vtanh.pop %v1738
          %v1799 = vtanh.pop %v1743
          %v1800 = vtanh.pop %v1746
          %v1801 = vmul.f32 %v1751, 0.5
          %v1802 = vmul.f32 %v1754, 0.5
          %v1803 = vmul.f32 %v1759, 0.5
          %v1804 = vmul.f32 %v1762, 0.5
          %v1805 = vtanh.pop %v1801
          %v1806 = vtanh.pop %v1802
          %v1807 = vtanh.pop %v1803
          %v1808 = vtanh.pop %v1804
          %v1809 = vmul.f32 %v1805, 0.5
          %v1810 = vmul.f32 %v1806, 0.5
          %v1811 = vmul.f32 %v1807, 0.5
          %v1812 = vmul.f32 %v1808, 0.5
          %v1813 = vadd.f32 %v1809, 0.5
          %v1814 = vadd.f32 %v1810, 0.5
          %v1815 = vadd.f32 %v1811, 0.5
          %v1816 = vadd.f32 %v1812, 0.5
          %v1817 = vmul.f32 %v1793, %v1287
          %v1818 = vmul.f32 %v1794, %v1288
          %v1819 = vmul.f32 %v1795, %v1289
          %v1820 = vmul.f32 %v1796, %v1290
          %v1821 = vmul.f32 %v1777, %v1797
          %v1822 = vmul.f32 %v1778, %v1798
          %v1823 = vmul.f32 %v1779, %v1799
          %v1824 = vmul.f32 %v1780, %v1800
          %v1825 = vadd.f32 %v1817, %v1821
          %v1826 = vadd.f32 %v1818, %v1822
          %v1827 = vadd.f32 %v1819, %v1823
          %v1828 = vadd.f32 %v1820, %v1824
          %v1829 = vtanh.pop %v1825
          %v1830 = vtanh.pop %v1826
          %v1831 = vtanh.pop %v1827
          %v1832 = vtanh.pop %v1828
          %v1833 = vmul.f32 %v1813, %v1829
          %v1834 = vmul.f32 %v1814, %v1830
          %v1835 = vmul.f32 %v1815, %v1831
          %v1836 = vmul.f32 %v1816, %v1832
          %1837 = vst [vmem:[#allocation3 + $0x20] sm:$0xff] %v1833
          %1838 = vst [vmem:[#allocation3 + $0x28] sm:$0xff] %v1834
          %1839 = vst [vmem:[#allocation3 + $0x30] sm:$0xff] %v1835
          %1840 = vst [vmem:[#allocation3 + $0x38] sm:$0xff] %v1836
          %v1841 = vstv %s1278
          %vm1842 = vcmp.eq.s32.totalorder %v432, %v1841
          %v1843 = vsel %vm1842, %v1833, %v1291
          %v1844 = vsel %vm1842, %v1834, %v1292
          %v1845 = vsel %vm1842, %v1835, %v1293
          %v1846 = vsel %vm1842, %v1836, %v1294
        $region53: #{tpu_custom_call.1} parent=47 // loop_footer
          %s1280 = sadd.s32 %s1278, 1
        $region54: #{tpu_custom_call.1} parent=47 // loop_footer_branch
          %1277 = sbr.rel target = $region50
        $region55: #{tpu_custom_call.1} parent=47 // loop_exit
          _
        %1847 = vst [vmem:[%s289] sm:$0xff] %v1291
        %1848 = vst [vmem:[%s289 + $0x8] sm:$0xff] %v1292
        %1849 = vst [vmem:[%s289 + $0x10] sm:$0xff] %v1293
        %1850 = vst [vmem:[%s289 + $0x18] sm:$0xff] %v1294
        %s1851 = sand.u32 %s193, 1
        %s1852 = scalar_lea.sflag [#allocation7], %s1851
        %s1853 = sand.u32 %s193, 1
        %s1854 = smul.addr %s1853, 32
        %s1855 = scalar_lea.vmem [#allocation6], %s1854
        // Predicated region
        $region56: #{tpu_custom_call.1} parent=47 // pred_check
          %p1856 = pneg %p203
        $region57: #{tpu_custom_call.1} parent=47 // pred_check_branch
          %1858 = sbr.rel (%p1856) target = $region59
        $region58: #{tpu_custom_call.1} parent=47 // pred_region
          %s1860 = ssub.s32 512, 512
          %1861 = vsyncadd %s1852, %s1860
          %s1862 = smul.addr %s28, 128
          %s1863 = scalar_lea.hbm %s8, %s1862
          %s1864 = sshll.u32 %s1855, 4
          %s1865 = int_to_ptr.vmem [resolvable:$true] %s1864
          %1870 = dma.vmem_to_hbm [thread:$0]  %s1865, 512, %s1863, %s1852, 128, 256, 8
        $region59: #{tpu_custom_call.1} parent=47 // pred_fallthru
          _
      $region48: #{tpu_custom_call.1} parent=5 // pred_fallthru
        _
      %p1871 = scmp.le.s32.totalorder 2, %s23
      // Predicated region
      $region60: #{tpu_custom_call.1} parent=5 // pred_check
        %p1872 = pneg %p1871
      $region61: #{tpu_custom_call.1} parent=5 // pred_check_branch
        %1874 = sbr.rel (%p1872) target = $region63
      $region62: #{tpu_custom_call.1} parent=5 // pred_region
        %s1875 = ssub.s32 %s23, 2
        // Predicated region
        $region64: #{tpu_custom_call.1} parent=62 // pred_check
          %p1876 = pneg %p209
        $region65: #{tpu_custom_call.1} parent=62 // pred_check_branch
          %1878 = sbr.rel (%p1876) target = $region67
        $region66: #{tpu_custom_call.1} parent=62 // pred_region
          %s1879 = sand.u32 %s194, 1
          %s1880 = scalar_lea.sflag [#allocation7], %s1879
          %s1881 = sand.u32 %s194, 1
          %s1882 = smul.addr %s1881, 32
          %s1883 = scalar_lea.vmem [#allocation6], %s1882
          %1884 = dma.done %s1880, 512
        $region67: #{tpu_custom_call.1} parent=62 // pred_fallthru
          _
      $region63: #{tpu_custom_call.1} parent=5 // pred_fallthru
        _
    $region6: #{tpu_custom_call.1} parent=1 // loop_footer
      %s27 = sadd.s32 1, %s23
    $region7: #{tpu_custom_call.1} parent=1 // loop_footer_branch
      %22 = sbr.rel target = $region3
    $region8: #{tpu_custom_call.1} parent=1 // loop_exit
      _
    %1885 = vsyncpa [#allocation7], 1
    %s1886 = scalar_lea.sflag [#allocation7], 1
    %1887 = vsyncpa %s1886, 1

</llo_original>
